<compile_context>
chip_gen: v5e
topology: v5e:2x2
jax: 0.10.0
libtpu: 0.0.40
codegen_flags: <defaults>
</compile_context>

<pallas_src>
import math
import functools

import jax
import jax.numpy as jnp
from jax import lax
from jax.experimental import pallas as pl
from jax.experimental.pallas import tpu as pltpu

_EPS = 1e-7
_LANE = 128


def _atan(x):
    """Elementwise arctan via Cephes-style range reduction + odd polynomial (VPU/EUP)."""
    ax = jnp.abs(x)
    big = ax > 2.414213562373095                                    # tan(3*pi/8)
    mid = jnp.logical_and(ax > 0.4142135623730951, jnp.logical_not(big))  # tan(pi/8)
    xr = jnp.where(big, -pl.reciprocal(ax + 1e-30, approx=True),
                   jnp.where(mid, (ax - 1.0) * pl.reciprocal(ax + 1.0, approx=True), ax))
    y0 = jnp.where(big, math.pi / 2.0, jnp.where(mid, math.pi / 4.0, 0.0))
    z = xr * xr
    p = (((8.05374449538e-2 * z - 1.38776856032e-1) * z + 1.99777106478e-1) * z
         - 3.33329491539e-1)
    y = y0 + p * z * xr + xr
    return jnp.where(x < 0, -y, y)


def _bbox_loss_kernel(*refs, reg_max, n_chunks, use_dfl):
    if use_dfl:
        pb_ref, tb_ref, w_ref, mask_ref, anc_ref, pd_ref, iou_ref, dfl_ref = refs
    else:
        pb_ref, tb_ref, w_ref, mask_ref, iou_ref = refs

    bsz = mask_ref.shape[0]
    r1 = reg_max + 1

    def chunk_body(ci, carry):
        start = pl.multiple_of(ci * _LANE, _LANE)
        sl = pl.ds(start, _LANE)

        b1_x1 = pb_ref[0, :, sl].astype(jnp.float32)
        b1_y1 = pb_ref[1, :, sl].astype(jnp.float32)
        b1_x2 = pb_ref[2, :, sl].astype(jnp.float32)
        b1_y2 = pb_ref[3, :, sl].astype(jnp.float32)
        b2_x1 = tb_ref[0, :, sl].astype(jnp.float32)
        b2_y1 = tb_ref[1, :, sl].astype(jnp.float32)
        b2_x2 = tb_ref[2, :, sl].astype(jnp.float32)
        b2_y2 = tb_ref[3, :, sl].astype(jnp.float32)
        mask = mask_ref[:, sl] > 0.0                                # (B, 128) bool
        weight = w_ref[:, sl].astype(jnp.float32)                   # (B, 128)

        # ---- CIoU (xywh=False) ----
        w1 = b1_x2 - b1_x1
        h1 = b1_y2 - b1_y1 + _EPS
        w2 = b2_x2 - b2_x1
        h2 = b2_y2 - b2_y1 + _EPS
        inter = (jnp.maximum(jnp.minimum(b1_x2, b2_x2) - jnp.maximum(b1_x1, b2_x1), 0.0)
                 * jnp.maximum(jnp.minimum(b1_y2, b2_y2) - jnp.maximum(b1_y1, b2_y1), 0.0))
        union = w1 * h1 + w2 * h2 - inter + _EPS
        iou = inter * pl.reciprocal(union, approx=True)
        cw = jnp.maximum(b1_x2, b2_x2) - jnp.minimum(b1_x1, b2_x1)
        ch = jnp.maximum(b1_y2, b2_y2) - jnp.minimum(b1_y1, b2_y1)
        c2 = cw * cw + ch * ch + _EPS
        rho2 = ((b2_x1 + b2_x2 - b1_x1 - b1_x2) ** 2
                + (b2_y1 + b2_y2 - b1_y1 - b1_y2) ** 2) * 0.25
        v = (4.0 / math.pi ** 2) * (_atan(w2 * pl.reciprocal(h2, approx=True))
                                    - _atan(w1 * pl.reciprocal(h1, approx=True))) ** 2
        alpha = v * pl.reciprocal(v - iou + (1.0 + _EPS), approx=True)
        ciou = iou - (rho2 * pl.reciprocal(c2, approx=True) + v * alpha)

        iou_part = jnp.where(mask, (1.0 - ciou) * weight, 0.0)

        if not use_dfl:                      # static gate: DFL path never traced
            return carry + iou_part

        iou_acc, dfl_acc = carry
        iou_acc = iou_acc + iou_part

        # ---- DFL: lane-dense layout (bins on sublanes, anchors on lanes) ----
        anc = anc_ref[:, sl].astype(jnp.float32)                    # (2, 128)
        ax_ = anc[0:1]                                              # (1, 128)
        ay_ = anc[1:2]
        ltrb = (ax_ - b2_x1, ay_ - b2_y1, b2_x2 - ax_, b2_y2 - ay_)  # bbox2dist order

        bins = lax.broadcasted_iota(jnp.int32, (bsz, r1, _LANE), 1)

        dfl_sum = jnp.zeros((bsz, _LANE), jnp.float32)
        for c in range(4):
            tgt = jnp.clip(ltrb[c], 0.0, reg_max - 0.01)            # (B, 128)
            tl = jnp.floor(tgt)
            tl_i = tl.astype(jnp.int32)
            wl = (tl + 1.0) - tgt
            wr = 1.0 - wl

            logits = pd_ref[c, :, :, sl].astype(jnp.float32)        # (B, r1, 128)
            m = jnp.max(logits, axis=1)                             # (B, 128)
            lse = m + jnp.log(jnp.sum(jnp.exp(logits - m[:, None, :]), axis=1))
            # fused one-hot gather: wl*logits[tl] + wr*logits[tl+1] in one select+reduce
            sel = (jnp.where(bins == tl_i[:, None, :], wl[:, None, :], 0.0)
                   + jnp.where(bins == tl_i[:, None, :] + 1, wr[:, None, :], 0.0))
            p = jnp.sum(logits * sel, axis=1)                       # (B, 128)
            # wl + wr == 1  =>  wl*(lse - p_tl) + wr*(lse - p_tr) == lse - p
            dfl_sum = dfl_sum + (lse - p)

        dfl_acc = dfl_acc + jnp.where(mask, (dfl_sum * 0.25) * weight, 0.0)
        return iou_acc, dfl_acc

    zero = jnp.zeros((bsz, _LANE), jnp.float32)
    if use_dfl:
        iou_acc, dfl_acc = lax.fori_loop(0, n_chunks, chunk_body, (zero, zero),
                                         unroll=True)
        dfl_ref[...] = dfl_acc[None]
    else:
        iou_acc = lax.fori_loop(0, n_chunks, chunk_body, zero, unroll=True)
    iou_ref[...] = iou_acc[None]


class BboxLossPallas:
    """Pallas-TPU implementation of lib/core/tal.py::BboxLoss.forward (forward only)."""

    def __init__(self, reg_max, use_dfl=False):
        self.reg_max = reg_max
        self.use_dfl = use_dfl

    def __call__(self, pred_dist, pred_bboxes, anchor_points, target_bboxes,
                 target_scores, target_scores_sum, fg_mask):
        B, N, _ = pred_bboxes.shape
        r1 = self.reg_max + 1

        # Tile geometry: anchors on the 128-lane axis, DMA tile of up to 512 lanes
        # processed in 128-lane vreg chunks; N padded to a multiple of the tile.
        n128 = -(-N // _LANE)
        chunks_per_tile = min(4, n128)
        tile_n = _LANE * chunks_per_tile
        num_tiles = -(-n128 // chunks_per_tile)
        n_pad = num_tiles * tile_n

        def pad_n(x):
            pad = n_pad - x.shape[-1]
            if pad == 0:
                return x
            return jnp.pad(x, [(0, 0)] * (x.ndim - 1) + [(0, pad)])

        # Coordinate-major, anchors on the lane axis; keep native dtype (bf16 ok).
        pb = pad_n(jnp.moveaxis(pred_bboxes, -1, 0))                 # (4, B, Np)
        tb = pad_n(jnp.moveaxis(target_bboxes, -1, 0))               # (4, B, Np)
        weight = pad_n(target_scores.sum(-1))                        # (B, Np) pre-reduced
        mask = pad_n(fg_mask.astype(jnp.float32))                    # (B, Np)

        operands = [pb, tb, weight, mask]
        in_specs = [
            pl.BlockSpec((4, B, tile_n), lambda i: (0, 0, i)),
            pl.BlockSpec((4, B, tile_n), lambda i: (0, 0, i)),
            pl.BlockSpec((B, tile_n), lambda i: (0, i)),
            pl.BlockSpec((B, tile_n), lambda i: (0, i)),
        ]
        if self.use_dfl:
            anc = pad_n(anchor_points.T)                             # (2, Np)
            # (B, N, 4*r1) -> (4, B, r1, N): bins on sublanes, anchors on lanes.
            pd = pad_n(jnp.transpose(pred_dist.reshape(B, N, 4, r1), (2, 0, 3, 1)))
            operands += [anc, pd]
            in_specs += [
                pl.BlockSpec((2, tile_n), lambda i: (0, i)),
                pl.BlockSpec((4, B, r1, tile_n), lambda i: (0, 0, 0, i)),
            ]

        part_shape = jax.ShapeDtypeStruct((num_tiles, B, _LANE), jnp.float32)
        part_spec = pl.BlockSpec((1, B, _LANE), lambda i: (i, 0, 0))
        if self.use_dfl:
            out_shape = (part_shape, part_shape)
            out_specs = (part_spec, part_spec)
        else:
            out_shape = part_shape
            out_specs = part_spec

        kernel = functools.partial(_bbox_loss_kernel, reg_max=self.reg_max,
                                   n_chunks=chunks_per_tile, use_dfl=self.use_dfl)

        outs = pl.pallas_call(
            kernel,
            grid=(num_tiles,),
            in_specs=in_specs,
            out_specs=out_specs,
            out_shape=out_shape,
            compiler_params=pltpu.CompilerParams(
                dimension_semantics=("parallel",),        # megacore split on v7x
                vmem_limit_bytes=32 * 1024 * 1024),
        )(*operands)

        tss = jnp.asarray(target_scores_sum, jnp.float32)
        if self.use_dfl:
            iou_part, dfl_part = outs
            loss_iou = jnp.sum(iou_part) / tss
            loss_dfl = jnp.sum(dfl_part) / tss
        else:
            loss_iou = jnp.sum(outs) / tss
            loss_dfl = jnp.float32(0.0)
        return loss_iou, loss_dfl


# ---------------- pure-JAX reference (mirrors the torch code) ----------------
def _ref_ciou(box1, box2, eps=1e-7):
    b1_x1, b1_y1, b1_x2, b1_y2 = jnp.split(box1, 4, -1)
    b2_x1, b2_y1, b2_x2, b2_y2 = jnp.split(box2, 4, -1)
    w1, h1 = b1_x2 - b1_x1, b1_y2 - b1_y1 + eps
    w2, h2 = b2_x2 - b2_x1, b2_y2 - b2_y1 + eps
    inter = (jnp.maximum(jnp.minimum(b1_x2, b2_x2) - jnp.maximum(b1_x1, b2_x1), 0.0)
             * jnp.maximum(jnp.minimum(b1_y2, b2_y2) - jnp.maximum(b1_y1, b2_y1), 0.0))
    union = w1 * h1 + w2 * h2 - inter + eps
    iou = inter / union
    cw = jnp.maximum(b1_x2, b2_x2) - jnp.minimum(b1_x1, b2_x1)
    ch = jnp.maximum(b1_y2, b2_y2) - jnp.minimum(b1_y1, b2_y1)
    c2 = cw ** 2 + ch ** 2 + eps
    rho2 = ((b2_x1 + b2_x2 - b1_x1 - b1_x2) ** 2
            + (b2_y1 + b2_y2 - b1_y1 - b1_y2) ** 2) / 4
    v = 4 / math.pi ** 2 * (jnp.arctan(w2 / h2) - jnp.arctan(w1 / h1)) ** 2
    alpha = v / (v - iou + (1 + eps))
    return iou - (rho2 / c2 + v * alpha)


def _ref_forward(pred_dist, pred_bboxes, anchor_points, target_bboxes,
                 target_scores, target_scores_sum, fg_mask, reg_max, use_dfl):
    mask = fg_mask.astype(jnp.float32)
    weight = target_scores.sum(-1)
    ciou = _ref_ciou(pred_bboxes, target_bboxes)[..., 0]
    loss_iou = jnp.sum(jnp.where(mask > 0, (1.0 - ciou) * weight, 0.0)) / target_scores_sum
    if not use_dfl:
        return loss_iou, jnp.float32(0.0)
    B, N, _ = pred_bboxes.shape
    r1 = reg_max + 1
    x1y1, x2y2 = target_bboxes[..., :2], target_bboxes[..., 2:]
    ltrb = jnp.clip(jnp.concatenate([anchor_points[None] - x1y1,
                                     x2y2 - anchor_points[None]], -1), 0, reg_max - 0.01)
    tl = jnp.floor(ltrb).astype(jnp.int32)
    tr = tl + 1
    wl = tr.astype(jnp.float32) - ltrb
    wr = 1.0 - wl
    logits = pred_dist.reshape(B, N, 4, r1)
    logp = jax.nn.log_softmax(logits, axis=-1)
    ce_l = -jnp.take_along_axis(logp, tl[..., None], axis=-1)[..., 0]
    ce_r = -jnp.take_along_axis(logp, tr[..., None], axis=-1)[..., 0]
    dfl = (ce_l * wl + ce_r * wr).mean(-1)
    loss_dfl = jnp.sum(jnp.where(mask > 0, dfl * weight, 0.0)) / target_scores_sum
    return loss_iou, loss_dfl


if __name__ == "__main__":
    key = jax.random.PRNGKey(0)
    B, N, C, reg_max = 2, 64, 4, 16
    keys = jax.random.split(key, 7)

    anchor_points = jax.random.uniform(keys[0], (N, 2), jnp.float32, 4.0, 12.0)
    t_off = jax.random.uniform(keys[1], (B, N, 4), jnp.float32, 0.5, 3.5)
    target_bboxes = jnp.concatenate([anchor_points[None] - t_off[..., :2],
                                     anchor_points[None] + t_off[..., 2:]], -1)
    p_off = jax.random.uniform(keys[2], (B, N, 4), jnp.float32, 0.5, 3.5)
    pred_bboxes = jnp.concatenate([anchor_points[None] - p_off[..., :2],
                                   anchor_points[None] + p_off[..., 2:]], -1)
    pred_dist = jax.random.normal(keys[3], (B, N, 4 * (reg_max + 1)), jnp.float32)
    target_scores = jax.random.uniform(keys[4], (B, N, C), jnp.float32)
    fg_mask = jax.random.bernoulli(keys[5], 0.5, (B, N))
    target_scores_sum = jnp.maximum(target_scores.sum(), 1.0)

    # ---- use_dfl=True path ----
    loss_fn = BboxLossPallas(reg_max=reg_max, use_dfl=True)
    loss_iou, loss_dfl = loss_fn(pred_dist, pred_bboxes, anchor_points, target_bboxes,
                                 target_scores, target_scores_sum, fg_mask)
    jax.block_until_ready((loss_iou, loss_dfl))

    ref_iou, ref_dfl = _ref_forward(pred_dist, pred_bboxes, anchor_points, target_bboxes,
                                    target_scores, target_scores_sum, fg_mask,
                                    reg_max, True)
    assert jnp.allclose(loss_iou, ref_iou, rtol=2e-3, atol=2e-3), (loss_iou, ref_iou)
    assert jnp.allclose(loss_dfl, ref_dfl, rtol=2e-3, atol=2e-3), (loss_dfl, ref_dfl)

    # ---- use_dfl=False path (DFL statically gated out; pred_dist never touched) ----
    loss_fn_nodfl = BboxLossPallas(reg_max=reg_max, use_dfl=False)
    l_iou2, l_dfl2 = loss_fn_nodfl(pred_dist, pred_bboxes, anchor_points, target_bboxes,
                                   target_scores, target_scores_sum, fg_mask)
    jax.block_until_ready((l_iou2, l_dfl2))
    assert jnp.allclose(l_iou2, ref_iou, rtol=2e-3, atol=2e-3), (l_iou2, ref_iou)
    assert float(l_dfl2) == 0.0

    print("KERNEL_OK")
</pallas_src>

<mosaic_0001>
module attributes {stable_mosaic.version = 11 : i64} {
  func.func @_bbox_loss_kernel(%arg0: i32, %arg1: memref<4x2x128xf32, #tpu.memory_space<vmem>>, %arg2: memref<4x2x128xf32, #tpu.memory_space<vmem>>, %arg3: memref<2x128xf32, #tpu.memory_space<vmem>>, %arg4: memref<2x128xf32, #tpu.memory_space<vmem>>, %arg5: memref<2x128xf32, #tpu.memory_space<vmem>>, %arg6: memref<4x2x17x128xf32, #tpu.memory_space<vmem>>, %arg7: memref<1x2x128xf32, #tpu.memory_space<vmem>>, %arg8: memref<1x2x128xf32, #tpu.memory_space<vmem>>) attributes {dimension_semantics = [#tpu.dimension_semantics<parallel>], iteration_bounds = array<i64: 1>, scalar_prefetch = 0 : i64, scratch_operands = 0 : i64, tpu.core_type = #tpu.core_type<tc>, window_params = [{transform_indices = @transform_0, window_bounds = array<i64: 4, 2, 128>}, {transform_indices = @transform_1, window_bounds = array<i64: 4, 2, 128>}, {transform_indices = @transform_2, window_bounds = array<i64: 2, 128>}, {transform_indices = @transform_3, window_bounds = array<i64: 2, 128>}, {transform_indices = @transform_4, window_bounds = array<i64: 2, 128>}, {transform_indices = @transform_5, window_bounds = array<i64: 4, 2, 17, 128>}, {transform_indices = @transform_6, window_bounds = array<i64: 1, 2, 128>}, {transform_indices = @transform_7, window_bounds = array<i64: 1, 2, 128>}]} {
    %cst = arith.constant 0.000000e+00 : f32
    %0 = vector.broadcast %cst : f32 to vector<2x128xf32>
    %c0_i32 = arith.constant 0 : i32
    %c128_i32 = arith.constant 128 : i32
    %1 = arith.muli %c0_i32, %c128_i32 : i32
    %2 = tpu.assume_multiple %1, 128 : i32
    %c0 = arith.constant 0 : index
    %c0_0 = arith.constant 0 : index
    %3 = arith.index_cast %2 : i32 to index
    %4 = vector.load %arg1[%c0, %c0_0, %3] : memref<4x2x128xf32, #tpu.memory_space<vmem>>, vector<1x2x128xf32>
    %5 = vector.shape_cast %4 : vector<1x2x128xf32> to vector<2x128xf32>
    %c1 = arith.constant 1 : index
    %c0_1 = arith.constant 0 : index
    %6 = arith.index_cast %2 : i32 to index
    %7 = vector.load %arg1[%c1, %c0_1, %6] : memref<4x2x128xf32, #tpu.memory_space<vmem>>, vector<1x2x128xf32>
    %8 = vector.shape_cast %7 : vector<1x2x128xf32> to vector<2x128xf32>
    %c2 = arith.constant 2 : index
    %c0_2 = arith.constant 0 : index
    %9 = arith.index_cast %2 : i32 to index
    %10 = vector.load %arg1[%c2, %c0_2, %9] : memref<4x2x128xf32, #tpu.memory_space<vmem>>, vector<1x2x128xf32>
    %11 = vector.shape_cast %10 : vector<1x2x128xf32> to vector<2x128xf32>
    %c3 = arith.constant 3 : index
    %c0_3 = arith.constant 0 : index
    %12 = arith.index_cast %2 : i32 to index
    %13 = vector.load %arg1[%c3, %c0_3, %12] : memref<4x2x128xf32, #tpu.memory_space<vmem>>, vector<1x2x128xf32>
    %14 = vector.shape_cast %13 : vector<1x2x128xf32> to vector<2x128xf32>
    %c0_4 = arith.constant 0 : index
    %c0_5 = arith.constant 0 : index
    %15 = arith.index_cast %2 : i32 to index
    %16 = vector.load %arg2[%c0_4, %c0_5, %15] : memref<4x2x128xf32, #tpu.memory_space<vmem>>, vector<1x2x128xf32>
    %17 = vector.shape_cast %16 : vector<1x2x128xf32> to vector<2x128xf32>
    %c1_6 = arith.constant 1 : index
    %c0_7 = arith.constant 0 : index
    %18 = arith.index_cast %2 : i32 to index
    %19 = vector.load %arg2[%c1_6, %c0_7, %18] : memref<4x2x128xf32, #tpu.memory_space<vmem>>, vector<1x2x128xf32>
    %20 = vector.shape_cast %19 : vector<1x2x128xf32> to vector<2x128xf32>
    %c2_8 = arith.constant 2 : index
    %c0_9 = arith.constant 0 : index
    %21 = arith.index_cast %2 : i32 to index
    %22 = vector.load %arg2[%c2_8, %c0_9, %21] : memref<4x2x128xf32, #tpu.memory_space<vmem>>, vector<1x2x128xf32>
    %23 = vector.shape_cast %22 : vector<1x2x128xf32> to vector<2x128xf32>
    %c3_10 = arith.constant 3 : index
    %c0_11 = arith.constant 0 : index
    %24 = arith.index_cast %2 : i32 to index
    %25 = vector.load %arg2[%c3_10, %c0_11, %24] : memref<4x2x128xf32, #tpu.memory_space<vmem>>, vector<1x2x128xf32>
    %26 = vector.shape_cast %25 : vector<1x2x128xf32> to vector<2x128xf32>
    %c0_12 = arith.constant 0 : index
    %27 = arith.index_cast %2 : i32 to index
    %28 = vector.load %arg4[%c0_12, %27] : memref<2x128xf32, #tpu.memory_space<vmem>>, vector<2x128xf32>
    %cst_13 = arith.constant 0.000000e+00 : f32
    %29 = vector.broadcast %cst_13 : f32 to vector<2x128xf32>
    %30 = arith.cmpf ogt, %28, %29 : vector<2x128xf32>
    %c0_14 = arith.constant 0 : index
    %31 = arith.index_cast %2 : i32 to index
    %32 = vector.load %arg3[%c0_14, %31] : memref<2x128xf32, #tpu.memory_space<vmem>>, vector<2x128xf32>
    %33 = arith.subf %11, %5 : vector<2x128xf32>
    %34 = arith.subf %14, %8 : vector<2x128xf32>
    %cst_15 = arith.constant 1.000000e-07 : f32
    %35 = vector.broadcast %cst_15 : f32 to vector<2x128xf32>
    %36 = arith.addf %34, %35 : vector<2x128xf32>
    %37 = arith.subf %23, %17 : vector<2x128xf32>
    %38 = arith.subf %26, %20 : vector<2x128xf32>
    %cst_16 = arith.constant 1.000000e-07 : f32
    %39 = vector.broadcast %cst_16 : f32 to vector<2x128xf32>
    %40 = arith.addf %38, %39 : vector<2x128xf32>
    %41 = arith.minimumf %11, %23 : vector<2x128xf32>
    %42 = arith.maximumf %5, %17 : vector<2x128xf32>
    %43 = arith.subf %41, %42 : vector<2x128xf32>
    %cst_17 = arith.constant 0.000000e+00 : f32
    %44 = vector.broadcast %cst_17 : f32 to vector<2x128xf32>
    %45 = arith.maximumf %43, %44 : vector<2x128xf32>
    %46 = arith.minimumf %14, %26 : vector<2x128xf32>
    %47 = arith.maximumf %8, %20 : vector<2x128xf32>
    %48 = arith.subf %46, %47 : vector<2x128xf32>
    %cst_18 = arith.constant 0.000000e+00 : f32
    %49 = vector.broadcast %cst_18 : f32 to vector<2x128xf32>
    %50 = arith.maximumf %48, %49 : vector<2x128xf32>
    %51 = arith.mulf %45, %50 : vector<2x128xf32>
    %52 = arith.mulf %33, %36 : vector<2x128xf32>
    %53 = arith.mulf %37, %40 : vector<2x128xf32>
    %54 = arith.addf %52, %53 : vector<2x128xf32>
    %55 = arith.subf %54, %51 : vector<2x128xf32>
    %cst_19 = arith.constant 1.000000e-07 : f32
    %56 = vector.broadcast %cst_19 : f32 to vector<2x128xf32>
    %57 = arith.addf %55, %56 : vector<2x128xf32>
    %58 = tpu.reciprocal %57 {approx = true} : vector<2x128xf32> -> vector<2x128xf32>
    %59 = arith.mulf %51, %58 : vector<2x128xf32>
    %60 = arith.maximumf %11, %23 : vector<2x128xf32>
    %61 = arith.minimumf %5, %17 : vector<2x128xf32>
    %62 = arith.subf %60, %61 : vector<2x128xf32>
    %63 = arith.maximumf %14, %26 : vector<2x128xf32>
    %64 = arith.minimumf %8, %20 : vector<2x128xf32>
    %65 = arith.subf %63, %64 : vector<2x128xf32>
    %66 = arith.mulf %62, %62 : vector<2x128xf32>
    %67 = arith.mulf %65, %65 : vector<2x128xf32>
    %68 = arith.addf %66, %67 : vector<2x128xf32>
    %cst_20 = arith.constant 1.000000e-07 : f32
    %69 = vector.broadcast %cst_20 : f32 to vector<2x128xf32>
    %70 = arith.addf %68, %69 : vector<2x128xf32>
    %71 = arith.addf %17, %23 : vector<2x128xf32>
    %72 = arith.subf %71, %5 : vector<2x128xf32>
    %73 = arith.subf %72, %11 : vector<2x128xf32>
    %74 = arith.mulf %73, %73 : vector<2x128xf32>
    %75 = arith.addf %20, %26 : vector<2x128xf32>
    %76 = arith.subf %75, %8 : vector<2x128xf32>
    %77 = arith.subf %76, %14 : vector<2x128xf32>
    %78 = arith.mulf %77, %77 : vector<2x128xf32>
    %79 = arith.addf %74, %78 : vector<2x128xf32>
    %cst_21 = arith.constant 2.500000e-01 : f32
    %80 = vector.broadcast %cst_21 : f32 to vector<2x128xf32>
    %81 = arith.mulf %79, %80 : vector<2x128xf32>
    %82 = tpu.reciprocal %40 {approx = true} : vector<2x128xf32> -> vector<2x128xf32>
    %83 = arith.mulf %37, %82 : vector<2x128xf32>
    %84 = math.absf %83 : vector<2x128xf32>
    %cst_22 = arith.constant 2.41421366 : f32
    %85 = vector.broadcast %cst_22 : f32 to vector<2x128xf32>
    %86 = arith.cmpf ogt, %84, %85 : vector<2x128xf32>
    %cst_23 = arith.constant 0.414213568 : f32
    %87 = vector.broadcast %cst_23 : f32 to vector<2x128xf32>
    %88 = arith.cmpf ogt, %84, %87 : vector<2x128xf32>
    %cst_24 = arith.constant dense<true> : vector<2x128xi1>
    %89 = arith.xori %86, %cst_24 : vector<2x128xi1>
    %90 = arith.andi %88, %89 : vector<2x128xi1>
    %cst_25 = arith.constant 1.000000e-30 : f32
    %91 = vector.broadcast %cst_25 : f32 to vector<2x128xf32>
    %92 = arith.addf %84, %91 : vector<2x128xf32>
    %93 = tpu.reciprocal %92 {approx = true} : vector<2x128xf32> -> vector<2x128xf32>
    %cst_26 = arith.constant 0.000000e+00 : f32
    %94 = vector.broadcast %cst_26 : f32 to vector<2x128xf32>
    %95 = arith.subf %94, %93 : vector<2x128xf32>
    %cst_27 = arith.constant 1.000000e+00 : f32
    %96 = vector.broadcast %cst_27 : f32 to vector<2x128xf32>
    %97 = arith.subf %84, %96 : vector<2x128xf32>
    %cst_28 = arith.constant 1.000000e+00 : f32
    %98 = vector.broadcast %cst_28 : f32 to vector<2x128xf32>
    %99 = arith.addf %84, %98 : vector<2x128xf32>
    %100 = tpu.reciprocal %99 {approx = true} : vector<2x128xf32> -> vector<2x128xf32>
    %101 = arith.mulf %97, %100 : vector<2x128xf32>
    %102 = arith.select %90, %101, %84 : vector<2x128xi1>, vector<2x128xf32>
    %103 = arith.select %86, %95, %102 : vector<2x128xi1>, vector<2x128xf32>
    %cst_29 = arith.constant 0.785398185 : f32
    %cst_30 = arith.constant 0.000000e+00 : f32
    %104 = vector.broadcast %cst_29 : f32 to vector<2x128xf32>
    %105 = vector.broadcast %cst_30 : f32 to vector<2x128xf32>
    %106 = arith.select %90, %104, %105 : vector<2x128xi1>, vector<2x128xf32>
    %cst_31 = arith.constant 1.57079637 : f32
    %107 = vector.broadcast %cst_31 : f32 to vector<2x128xf32>
    %108 = arith.select %86, %107, %106 : vector<2x128xi1>, vector<2x128xf32>
    %109 = arith.mulf %103, %103 : vector<2x128xf32>
    %cst_32 = arith.constant 0.0805374458 : f32
    %110 = vector.broadcast %cst_32 : f32 to vector<2x128xf32>
    %111 = arith.mulf %110, %109 : vector<2x128xf32>
    %cst_33 = arith.constant 0.138776854 : f32
    %112 = vector.broadcast %cst_33 : f32 to vector<2x128xf32>
    %113 = arith.subf %111, %112 : vector<2x128xf32>
    %114 = arith.mulf %113, %109 : vector<2x128xf32>
    %cst_34 = arith.constant 0.199777111 : f32
    %115 = vector.broadcast %cst_34 : f32 to vector<2x128xf32>
    %116 = arith.addf %114, %115 : vector<2x128xf32>
    %117 = arith.mulf %116, %109 : vector<2x128xf32>
    %cst_35 = arith.constant 0.333329499 : f32
    %118 = vector.broadcast %cst_35 : f32 to vector<2x128xf32>
    %119 = arith.subf %117, %118 : vector<2x128xf32>
    %120 = arith.mulf %119, %109 : vector<2x128xf32>
    %121 = arith.mulf %120, %103 : vector<2x128xf32>
    %122 = arith.addf %108, %121 : vector<2x128xf32>
    %123 = arith.addf %122, %103 : vector<2x128xf32>
    %cst_36 = arith.constant 0.000000e+00 : f32
    %124 = vector.broadcast %cst_36 : f32 to vector<2x128xf32>
    %125 = arith.cmpf olt, %83, %124 : vector<2x128xf32>
    %cst_37 = arith.constant 0.000000e+00 : f32
    %126 = vector.broadcast %cst_37 : f32 to vector<2x128xf32>
    %127 = arith.subf %126, %123 : vector<2x128xf32>
    %128 = arith.select %125, %127, %123 : vector<2x128xi1>, vector<2x128xf32>
    %129 = tpu.reciprocal %36 {approx = true} : vector<2x128xf32> -> vector<2x128xf32>
    %130 = arith.mulf %33, %129 : vector<2x128xf32>
    %131 = math.absf %130 : vector<2x128xf32>
    %cst_38 = arith.constant 2.41421366 : f32
    %132 = vector.broadcast %cst_38 : f32 to vector<2x128xf32>
    %133 = arith.cmpf ogt, %131, %132 : vector<2x128xf32>
    %cst_39 = arith.constant 0.414213568 : f32
    %134 = vector.broadcast %cst_39 : f32 to vector<2x128xf32>
    %135 = arith.cmpf ogt, %131, %134 : vector<2x128xf32>
    %cst_40 = arith.constant dense<true> : vector<2x128xi1>
    %136 = arith.xori %133, %cst_40 : vector<2x128xi1>
    %137 = arith.andi %135, %136 : vector<2x128xi1>
    %cst_41 = arith.constant 1.000000e-30 : f32
    %138 = vector.broadcast %cst_41 : f32 to vector<2x128xf32>
    %139 = arith.addf %131, %138 : vector<2x128xf32>
    %140 = tpu.reciprocal %139 {approx = true} : vector<2x128xf32> -> vector<2x128xf32>
    %cst_42 = arith.constant 0.000000e+00 : f32
    %141 = vector.broadcast %cst_42 : f32 to vector<2x128xf32>
    %142 = arith.subf %141, %140 : vector<2x128xf32>
    %cst_43 = arith.constant 1.000000e+00 : f32
    %143 = vector.broadcast %cst_43 : f32 to vector<2x128xf32>
    %144 = arith.subf %131, %143 : vector<2x128xf32>
    %cst_44 = arith.constant 1.000000e+00 : f32
    %145 = vector.broadcast %cst_44 : f32 to vector<2x128xf32>
    %146 = arith.addf %131, %145 : vector<2x128xf32>
    %147 = tpu.reciprocal %146 {approx = true} : vector<2x128xf32> -> vector<2x128xf32>
    %148 = arith.mulf %144, %147 : vector<2x128xf32>
    %149 = arith.select %137, %148, %131 : vector<2x128xi1>, vector<2x128xf32>
    %150 = arith.select %133, %142, %149 : vector<2x128xi1>, vector<2x128xf32>
    %cst_45 = arith.constant 0.785398185 : f32
    %cst_46 = arith.constant 0.000000e+00 : f32
    %151 = vector.broadcast %cst_45 : f32 to vector<2x128xf32>
    %152 = vector.broadcast %cst_46 : f32 to vector<2x128xf32>
    %153 = arith.select %137, %151, %152 : vector<2x128xi1>, vector<2x128xf32>
    %cst_47 = arith.constant 1.57079637 : f32
    %154 = vector.broadcast %cst_47 : f32 to vector<2x128xf32>
    %155 = arith.select %133, %154, %153 : vector<2x128xi1>, vector<2x128xf32>
    %156 = arith.mulf %150, %150 : vector<2x128xf32>
    %cst_48 = arith.constant 0.0805374458 : f32
    %157 = vector.broadcast %cst_48 : f32 to vector<2x128xf32>
    %158 = arith.mulf %157, %156 : vector<2x128xf32>
    %cst_49 = arith.constant 0.138776854 : f32
    %159 = vector.broadcast %cst_49 : f32 to vector<2x128xf32>
    %160 = arith.subf %158, %159 : vector<2x128xf32>
    %161 = arith.mulf %160, %156 : vector<2x128xf32>
    %cst_50 = arith.constant 0.199777111 : f32
    %162 = vector.broadcast %cst_50 : f32 to vector<2x128xf32>
    %163 = arith.addf %161, %162 : vector<2x128xf32>
    %164 = arith.mulf %163, %156 : vector<2x128xf32>
    %cst_51 = arith.constant 0.333329499 : f32
    %165 = vector.broadcast %cst_51 : f32 to vector<2x128xf32>
    %166 = arith.subf %164, %165 : vector<2x128xf32>
    %167 = arith.mulf %166, %156 : vector<2x128xf32>
    %168 = arith.mulf %167, %150 : vector<2x128xf32>
    %169 = arith.addf %155, %168 : vector<2x128xf32>
    %170 = arith.addf %169, %150 : vector<2x128xf32>
    %cst_52 = arith.constant 0.000000e+00 : f32
    %171 = vector.broadcast %cst_52 : f32 to vector<2x128xf32>
    %172 = arith.cmpf olt, %130, %171 : vector<2x128xf32>
    %cst_53 = arith.constant 0.000000e+00 : f32
    %173 = vector.broadcast %cst_53 : f32 to vector<2x128xf32>
    %174 = arith.subf %173, %170 : vector<2x128xf32>
    %175 = arith.select %172, %174, %170 : vector<2x128xi1>, vector<2x128xf32>
    %176 = arith.subf %128, %175 : vector<2x128xf32>
    %177 = arith.mulf %176, %176 : vector<2x128xf32>
    %cst_54 = arith.constant 0.405284733 : f32
    %178 = vector.broadcast %cst_54 : f32 to vector<2x128xf32>
    %179 = arith.mulf %178, %177 : vector<2x128xf32>
    %180 = arith.subf %179, %59 : vector<2x128xf32>
    %cst_55 = arith.constant 1.00000012 : f32
    %181 = vector.broadcast %cst_55 : f32 to vector<2x128xf32>
    %182 = arith.addf %180, %181 : vector<2x128xf32>
    %183 = tpu.reciprocal %182 {approx = true} : vector<2x128xf32> -> vector<2x128xf32>
    %184 = arith.mulf %179, %183 : vector<2x128xf32>
    %185 = tpu.reciprocal %70 {approx = true} : vector<2x128xf32> -> vector<2x128xf32>
    %186 = arith.mulf %81, %185 : vector<2x128xf32>
    %187 = arith.mulf %179, %184 : vector<2x128xf32>
    %188 = arith.addf %186, %187 : vector<2x128xf32>
    %189 = arith.subf %59, %188 : vector<2x128xf32>
    %cst_56 = arith.constant 1.000000e+00 : f32
    %190 = vector.broadcast %cst_56 : f32 to vector<2x128xf32>
    %191 = arith.subf %190, %189 : vector<2x128xf32>
    %192 = arith.mulf %191, %32 : vector<2x128xf32>
    %cst_57 = arith.constant 0.000000e+00 : f32
    %193 = vector.broadcast %cst_57 : f32 to vector<2x128xf32>
    %194 = arith.select %30, %192, %193 : vector<2x128xi1>, vector<2x128xf32>
    %195 = arith.addf %0, %194 : vector<2x128xf32>
    %c0_58 = arith.constant 0 : index
    %196 = arith.index_cast %2 : i32 to index
    %197 = vector.load %arg5[%c0_58, %196] : memref<2x128xf32, #tpu.memory_space<vmem>>, vector<2x128xf32>
    %198 = vector.extract_strided_slice %197 {offsets = [0, 0], sizes = [1, 128], strides = [1, 1]} : vector<2x128xf32> to vector<1x128xf32>
    %199 = vector.extract_strided_slice %197 {offsets = [1, 0], sizes = [1, 128], strides = [1, 1]} : vector<2x128xf32> to vector<1x128xf32>
    %200 = vector.broadcast %198 : vector<1x128xf32> to vector<2x128xf32>
    %201 = arith.subf %200, %17 : vector<2x128xf32>
    %202 = vector.broadcast %199 : vector<1x128xf32> to vector<2x128xf32>
    %203 = arith.subf %202, %20 : vector<2x128xf32>
    %204 = vector.broadcast %198 : vector<1x128xf32> to vector<2x128xf32>
    %205 = arith.subf %23, %204 : vector<2x128xf32>
    %206 = vector.broadcast %199 : vector<1x128xf32> to vector<2x128xf32>
    %207 = arith.subf %26, %206 : vector<2x128xf32>
    %208 = tpu.iota {dimensions = array<i32: 1>} : vector<2x17x128xi32>
    %cst_59 = arith.constant 0.000000e+00 : f32
    %209 = vector.broadcast %cst_59 : f32 to vector<2x128xf32>
    %cst_60 = arith.constant 0.000000e+00 : f32
    %cst_61 = arith.constant 1.599000e+01 : f32
    %210 = vector.broadcast %cst_60 : f32 to vector<2x128xf32>
    %211 = arith.maximumf %210, %201 : vector<2x128xf32>
    %212 = vector.broadcast %cst_61 : f32 to vector<2x128xf32>
    %213 = arith.minimumf %212, %211 : vector<2x128xf32>
    %214 = math.floor %213 : vector<2x128xf32>
    %215 = arith.fptosi %214 : vector<2x128xf32> to vector<2x128xi32>
    %cst_62 = arith.constant 1.000000e+00 : f32
    %216 = vector.broadcast %cst_62 : f32 to vector<2x128xf32>
    %217 = arith.addf %214, %216 : vector<2x128xf32>
    %218 = arith.subf %217, %213 : vector<2x128xf32>
    %cst_63 = arith.constant 1.000000e+00 : f32
    %219 = vector.broadcast %cst_63 : f32 to vector<2x128xf32>
    %220 = arith.subf %219, %218 : vector<2x128xf32>
    %c0_64 = arith.constant 0 : index
    %c0_65 = arith.constant 0 : index
    %c0_66 = arith.constant 0 : index
    %221 = arith.index_cast %2 : i32 to index
    %222 = vector.load %arg6[%c0_64, %c0_65, %c0_66, %221] : memref<4x2x17x128xf32, #tpu.memory_space<vmem>>, vector<1x2x17x128xf32>
    %223 = vector.shape_cast %222 : vector<1x2x17x128xf32> to vector<2x17x128xf32>
    %cst_67 = arith.constant dense<0xFF800000> : vector<2x128xf32>
    %224 = vector.multi_reduction <maximumf>, %223, %cst_67 [1] : vector<2x17x128xf32> to vector<2x128xf32>
    %225 = vector.shape_cast %224 : vector<2x128xf32> to vector<2x1x128xf32>
    %226 = vector.broadcast %225 : vector<2x1x128xf32> to vector<2x17x128xf32>
    %227 = arith.subf %223, %226 : vector<2x17x128xf32>
    %228 = math.exp %227 : vector<2x17x128xf32>
    %cst_68 = arith.constant dense<0.000000e+00> : vector<2x128xf32>
    %229 = vector.multi_reduction <add>, %228, %cst_68 [1] : vector<2x17x128xf32> to vector<2x128xf32>
    %230 = math.log %229 : vector<2x128xf32>
    %231 = arith.addf %224, %230 : vector<2x128xf32>
    %232 = vector.shape_cast %215 : vector<2x128xi32> to vector<2x1x128xi32>
    %233 = vector.broadcast %232 : vector<2x1x128xi32> to vector<2x17x128xi32>
    %234 = arith.cmpi eq, %208, %233 : vector<2x17x128xi32>
    %235 = vector.shape_cast %218 : vector<2x128xf32> to vector<2x1x128xf32>
    %cst_69 = arith.constant 0.000000e+00 : f32
    %236 = vector.shape_cast %235 : vector<2x1x128xf32> to vector<2x1x128xf32>
    %237 = vector.broadcast %236 : vector<2x1x128xf32> to vector<2x17x128xf32>
    %238 = vector.broadcast %cst_69 : f32 to vector<2x17x128xf32>
    %239 = arith.select %234, %237, %238 : vector<2x17x128xi1>, vector<2x17x128xf32>
    %240 = vector.shape_cast %215 : vector<2x128xi32> to vector<2x1x128xi32>
    %c1_i32 = arith.constant 1 : i32
    %241 = vector.broadcast %c1_i32 : i32 to vector<2x1x128xi32>
    %242 = arith.addi %240, %241 : vector<2x1x128xi32>
    %243 = vector.broadcast %242 : vector<2x1x128xi32> to vector<2x17x128xi32>
    %244 = arith.cmpi eq, %208, %243 : vector<2x17x128xi32>
    %245 = vector.shape_cast %220 : vector<2x128xf32> to vector<2x1x128xf32>
    %cst_70 = arith.constant 0.000000e+00 : f32
    %246 = vector.shape_cast %245 : vector<2x1x128xf32> to vector<2x1x128xf32>
    %247 = vector.broadcast %246 : vector<2x1x128xf32> to vector<2x17x128xf32>
    %248 = vector.broadcast %cst_70 : f32 to vector<2x17x128xf32>
    %249 = arith.select %244, %247, %248 : vector<2x17x128xi1>, vector<2x17x128xf32>
    %250 = arith.addf %239, %249 : vector<2x17x128xf32>
    %251 = arith.mulf %223, %250 : vector<2x17x128xf32>
    %cst_71 = arith.constant dense<0.000000e+00> : vector<2x128xf32>
    %252 = vector.multi_reduction <add>, %251, %cst_71 [1] : vector<2x17x128xf32> to vector<2x128xf32>
    %253 = arith.subf %231, %252 : vector<2x128xf32>
    %254 = arith.addf %209, %253 : vector<2x128xf32>
    %cst_72 = arith.constant 0.000000e+00 : f32
    %cst_73 = arith.constant 1.599000e+01 : f32
    %255 = vector.broadcast %cst_72 : f32 to vector<2x128xf32>
    %256 = arith.maximumf %255, %203 : vector<2x128xf32>
    %257 = vector.broadcast %cst_73 : f32 to vector<2x128xf32>
    %258 = arith.minimumf %257, %256 : vector<2x128xf32>
    %259 = math.floor %258 : vector<2x128xf32>
    %260 = arith.fptosi %259 : vector<2x128xf32> to vector<2x128xi32>
    %cst_74 = arith.constant 1.000000e+00 : f32
    %261 = vector.broadcast %cst_74 : f32 to vector<2x128xf32>
    %262 = arith.addf %259, %261 : vector<2x128xf32>
    %263 = arith.subf %262, %258 : vector<2x128xf32>
    %cst_75 = arith.constant 1.000000e+00 : f32
    %264 = vector.broadcast %cst_75 : f32 to vector<2x128xf32>
    %265 = arith.subf %264, %263 : vector<2x128xf32>
    %c1_76 = arith.constant 1 : index
    %c0_77 = arith.constant 0 : index
    %c0_78 = arith.constant 0 : index
    %266 = arith.index_cast %2 : i32 to index
    %267 = vector.load %arg6[%c1_76, %c0_77, %c0_78, %266] : memref<4x2x17x128xf32, #tpu.memory_space<vmem>>, vector<1x2x17x128xf32>
    %268 = vector.shape_cast %267 : vector<1x2x17x128xf32> to vector<2x17x128xf32>
    %cst_79 = arith.constant dense<0xFF800000> : vector<2x128xf32>
    %269 = vector.multi_reduction <maximumf>, %268, %cst_79 [1] : vector<2x17x128xf32> to vector<2x128xf32>
    %270 = vector.shape_cast %269 : vector<2x128xf32> to vector<2x1x128xf32>
    %271 = vector.broadcast %270 : vector<2x1x128xf32> to vector<2x17x128xf32>
    %272 = arith.subf %268, %271 : vector<2x17x128xf32>
    %273 = math.exp %272 : vector<2x17x128xf32>
    %cst_80 = arith.constant dense<0.000000e+00> : vector<2x128xf32>
    %274 = vector.multi_reduction <add>, %273, %cst_80 [1] : vector<2x17x128xf32> to vector<2x128xf32>
    %275 = math.log %274 : vector<2x128xf32>
    %276 = arith.addf %269, %275 : vector<2x128xf32>
    %277 = vector.shape_cast %260 : vector<2x128xi32> to vector<2x1x128xi32>
    %278 = vector.broadcast %277 : vector<2x1x128xi32> to vector<2x17x128xi32>
    %279 = arith.cmpi eq, %208, %278 : vector<2x17x128xi32>
    %280 = vector.shape_cast %263 : vector<2x128xf32> to vector<2x1x128xf32>
    %cst_81 = arith.constant 0.000000e+00 : f32
    %281 = vector.shape_cast %280 : vector<2x1x128xf32> to vector<2x1x128xf32>
    %282 = vector.broadcast %281 : vector<2x1x128xf32> to vector<2x17x128xf32>
    %283 = vector.broadcast %cst_81 : f32 to vector<2x17x128xf32>
    %284 = arith.select %279, %282, %283 : vector<2x17x128xi1>, vector<2x17x128xf32>
    %285 = vector.shape_cast %260 : vector<2x128xi32> to vector<2x1x128xi32>
    %c1_i32_82 = arith.constant 1 : i32
    %286 = vector.broadcast %c1_i32_82 : i32 to vector<2x1x128xi32>
    %287 = arith.addi %285, %286 : vector<2x1x128xi32>
    %288 = vector.broadcast %287 : vector<2x1x128xi32> to vector<2x17x128xi32>
    %289 = arith.cmpi eq, %208, %288 : vector<2x17x128xi32>
    %290 = vector.shape_cast %265 : vector<2x128xf32> to vector<2x1x128xf32>
    %cst_83 = arith.constant 0.000000e+00 : f32
    %291 = vector.shape_cast %290 : vector<2x1x128xf32> to vector<2x1x128xf32>
    %292 = vector.broadcast %291 : vector<2x1x128xf32> to vector<2x17x128xf32>
    %293 = vector.broadcast %cst_83 : f32 to vector<2x17x128xf32>
    %294 = arith.select %289, %292, %293 : vector<2x17x128xi1>, vector<2x17x128xf32>
    %295 = arith.addf %284, %294 : vector<2x17x128xf32>
    %296 = arith.mulf %268, %295 : vector<2x17x128xf32>
    %cst_84 = arith.constant dense<0.000000e+00> : vector<2x128xf32>
    %297 = vector.multi_reduction <add>, %296, %cst_84 [1] : vector<2x17x128xf32> to vector<2x128xf32>
    %298 = arith.subf %276, %297 : vector<2x128xf32>
    %299 = arith.addf %254, %298 : vector<2x128xf32>
    %cst_85 = arith.constant 0.000000e+00 : f32
    %cst_86 = arith.constant 1.599000e+01 : f32
    %300 = vector.broadcast %cst_85 : f32 to vector<2x128xf32>
    %301 = arith.maximumf %300, %205 : vector<2x128xf32>
    %302 = vector.broadcast %cst_86 : f32 to vector<2x128xf32>
    %303 = arith.minimumf %302, %301 : vector<2x128xf32>
    %304 = math.floor %303 : vector<2x128xf32>
    %305 = arith.fptosi %304 : vector<2x128xf32> to vector<2x128xi32>
    %cst_87 = arith.constant 1.000000e+00 : f32
    %306 = vector.broadcast %cst_87 : f32 to vector<2x128xf32>
    %307 = arith.addf %304, %306 : vector<2x128xf32>
    %308 = arith.subf %307, %303 : vector<2x128xf32>
    %cst_88 = arith.constant 1.000000e+00 : f32
    %309 = vector.broadcast %cst_88 : f32 to vector<2x128xf32>
    %310 = arith.subf %309, %308 : vector<2x128xf32>
    %c2_89 = arith.constant 2 : index
    %c0_90 = arith.constant 0 : index
    %c0_91 = arith.constant 0 : index
    %311 = arith.index_cast %2 : i32 to index
    %312 = vector.load %arg6[%c2_89, %c0_90, %c0_91, %311] : memref<4x2x17x128xf32, #tpu.memory_space<vmem>>, vector<1x2x17x128xf32>
    %313 = vector.shape_cast %312 : vector<1x2x17x128xf32> to vector<2x17x128xf32>
    %cst_92 = arith.constant dense<0xFF800000> : vector<2x128xf32>
    %314 = vector.multi_reduction <maximumf>, %313, %cst_92 [1] : vector<2x17x128xf32> to vector<2x128xf32>
    %315 = vector.shape_cast %314 : vector<2x128xf32> to vector<2x1x128xf32>
    %316 = vector.broadcast %315 : vector<2x1x128xf32> to vector<2x17x128xf32>
    %317 = arith.subf %313, %316 : vector<2x17x128xf32>
    %318 = math.exp %317 : vector<2x17x128xf32>
    %cst_93 = arith.constant dense<0.000000e+00> : vector<2x128xf32>
    %319 = vector.multi_reduction <add>, %318, %cst_93 [1] : vector<2x17x128xf32> to vector<2x128xf32>
    %320 = math.log %319 : vector<2x128xf32>
    %321 = arith.addf %314, %320 : vector<2x128xf32>
    %322 = vector.shape_cast %305 : vector<2x128xi32> to vector<2x1x128xi32>
    %323 = vector.broadcast %322 : vector<2x1x128xi32> to vector<2x17x128xi32>
    %324 = arith.cmpi eq, %208, %323 : vector<2x17x128xi32>
    %325 = vector.shape_cast %308 : vector<2x128xf32> to vector<2x1x128xf32>
    %cst_94 = arith.constant 0.000000e+00 : f32
    %326 = vector.shape_cast %325 : vector<2x1x128xf32> to vector<2x1x128xf32>
    %327 = vector.broadcast %326 : vector<2x1x128xf32> to vector<2x17x128xf32>
    %328 = vector.broadcast %cst_94 : f32 to vector<2x17x128xf32>
    %329 = arith.select %324, %327, %328 : vector<2x17x128xi1>, vector<2x17x128xf32>
    %330 = vector.shape_cast %305 : vector<2x128xi32> to vector<2x1x128xi32>
    %c1_i32_95 = arith.constant 1 : i32
    %331 = vector.broadcast %c1_i32_95 : i32 to vector<2x1x128xi32>
    %332 = arith.addi %330, %331 : vector<2x1x128xi32>
    %333 = vector.broadcast %332 : vector<2x1x128xi32> to vector<2x17x128xi32>
    %334 = arith.cmpi eq, %208, %333 : vector<2x17x128xi32>
    %335 = vector.shape_cast %310 : vector<2x128xf32> to vector<2x1x128xf32>
    %cst_96 = arith.constant 0.000000e+00 : f32
    %336 = vector.shape_cast %335 : vector<2x1x128xf32> to vector<2x1x128xf32>
    %337 = vector.broadcast %336 : vector<2x1x128xf32> to vector<2x17x128xf32>
    %338 = vector.broadcast %cst_96 : f32 to vector<2x17x128xf32>
    %339 = arith.select %334, %337, %338 : vector<2x17x128xi1>, vector<2x17x128xf32>
    %340 = arith.addf %329, %339 : vector<2x17x128xf32>
    %341 = arith.mulf %313, %340 : vector<2x17x128xf32>
    %cst_97 = arith.constant dense<0.000000e+00> : vector<2x128xf32>
    %342 = vector.multi_reduction <add>, %341, %cst_97 [1] : vector<2x17x128xf32> to vector<2x128xf32>
    %343 = arith.subf %321, %342 : vector<2x128xf32>
    %344 = arith.addf %299, %343 : vector<2x128xf32>
    %cst_98 = arith.constant 0.000000e+00 : f32
    %cst_99 = arith.constant 1.599000e+01 : f32
    %345 = vector.broadcast %cst_98 : f32 to vector<2x128xf32>
    %346 = arith.maximumf %345, %207 : vector<2x128xf32>
    %347 = vector.broadcast %cst_99 : f32 to vector<2x128xf32>
    %348 = arith.minimumf %347, %346 : vector<2x128xf32>
    %349 = math.floor %348 : vector<2x128xf32>
    %350 = arith.fptosi %349 : vector<2x128xf32> to vector<2x128xi32>
    %cst_100 = arith.constant 1.000000e+00 : f32
    %351 = vector.broadcast %cst_100 : f32 to vector<2x128xf32>
    %352 = arith.addf %349, %351 : vector<2x128xf32>
    %353 = arith.subf %352, %348 : vector<2x128xf32>
    %cst_101 = arith.constant 1.000000e+00 : f32
    %354 = vector.broadcast %cst_101 : f32 to vector<2x128xf32>
    %355 = arith.subf %354, %353 : vector<2x128xf32>
    %c3_102 = arith.constant 3 : index
    %c0_103 = arith.constant 0 : index
    %c0_104 = arith.constant 0 : index
    %356 = arith.index_cast %2 : i32 to index
    %357 = vector.load %arg6[%c3_102, %c0_103, %c0_104, %356] : memref<4x2x17x128xf32, #tpu.memory_space<vmem>>, vector<1x2x17x128xf32>
    %358 = vector.shape_cast %357 : vector<1x2x17x128xf32> to vector<2x17x128xf32>
    %cst_105 = arith.constant dense<0xFF800000> : vector<2x128xf32>
    %359 = vector.multi_reduction <maximumf>, %358, %cst_105 [1] : vector<2x17x128xf32> to vector<2x128xf32>
    %360 = vector.shape_cast %359 : vector<2x128xf32> to vector<2x1x128xf32>
    %361 = vector.broadcast %360 : vector<2x1x128xf32> to vector<2x17x128xf32>
    %362 = arith.subf %358, %361 : vector<2x17x128xf32>
    %363 = math.exp %362 : vector<2x17x128xf32>
    %cst_106 = arith.constant dense<0.000000e+00> : vector<2x128xf32>
    %364 = vector.multi_reduction <add>, %363, %cst_106 [1] : vector<2x17x128xf32> to vector<2x128xf32>
    %365 = math.log %364 : vector<2x128xf32>
    %366 = arith.addf %359, %365 : vector<2x128xf32>
    %367 = vector.shape_cast %350 : vector<2x128xi32> to vector<2x1x128xi32>
    %368 = vector.broadcast %367 : vector<2x1x128xi32> to vector<2x17x128xi32>
    %369 = arith.cmpi eq, %208, %368 : vector<2x17x128xi32>
    %370 = vector.shape_cast %353 : vector<2x128xf32> to vector<2x1x128xf32>
    %cst_107 = arith.constant 0.000000e+00 : f32
    %371 = vector.shape_cast %370 : vector<2x1x128xf32> to vector<2x1x128xf32>
    %372 = vector.broadcast %371 : vector<2x1x128xf32> to vector<2x17x128xf32>
    %373 = vector.broadcast %cst_107 : f32 to vector<2x17x128xf32>
    %374 = arith.select %369, %372, %373 : vector<2x17x128xi1>, vector<2x17x128xf32>
    %375 = vector.shape_cast %350 : vector<2x128xi32> to vector<2x1x128xi32>
    %c1_i32_108 = arith.constant 1 : i32
    %376 = vector.broadcast %c1_i32_108 : i32 to vector<2x1x128xi32>
    %377 = arith.addi %375, %376 : vector<2x1x128xi32>
    %378 = vector.broadcast %377 : vector<2x1x128xi32> to vector<2x17x128xi32>
    %379 = arith.cmpi eq, %208, %378 : vector<2x17x128xi32>
    %380 = vector.shape_cast %355 : vector<2x128xf32> to vector<2x1x128xf32>
    %cst_109 = arith.constant 0.000000e+00 : f32
    %381 = vector.shape_cast %380 : vector<2x1x128xf32> to vector<2x1x128xf32>
    %382 = vector.broadcast %381 : vector<2x1x128xf32> to vector<2x17x128xf32>
    %383 = vector.broadcast %cst_109 : f32 to vector<2x17x128xf32>
    %384 = arith.select %379, %382, %383 : vector<2x17x128xi1>, vector<2x17x128xf32>
    %385 = arith.addf %374, %384 : vector<2x17x128xf32>
    %386 = arith.mulf %358, %385 : vector<2x17x128xf32>
    %cst_110 = arith.constant dense<0.000000e+00> : vector<2x128xf32>
    %387 = vector.multi_reduction <add>, %386, %cst_110 [1] : vector<2x17x128xf32> to vector<2x128xf32>
    %388 = arith.subf %366, %387 : vector<2x128xf32>
    %389 = arith.addf %344, %388 : vector<2x128xf32>
    %cst_111 = arith.constant 2.500000e-01 : f32
    %390 = vector.broadcast %cst_111 : f32 to vector<2x128xf32>
    %391 = arith.mulf %389, %390 : vector<2x128xf32>
    %392 = arith.mulf %391, %32 : vector<2x128xf32>
    %cst_112 = arith.constant 0.000000e+00 : f32
    %393 = vector.broadcast %cst_112 : f32 to vector<2x128xf32>
    %394 = arith.select %30, %392, %393 : vector<2x128xi1>, vector<2x128xf32>
    %395 = arith.addf %0, %394 : vector<2x128xf32>
    %c1_i32_113 = arith.constant 1 : i32
    %396 = vector.shape_cast %395 : vector<2x128xf32> to vector<1x2x128xf32>
    %c0_114 = arith.constant 0 : index
    %c0_115 = arith.constant 0 : index
    %c0_116 = arith.constant 0 : index
    %397 = vector.load %arg8[%c0_114, %c0_115, %c0_116] : memref<1x2x128xf32, #tpu.memory_space<vmem>>, vector<1x2x128xf32>
    tpu.vector_store %arg8[%c0_114, %c0_115, %c0_116], %396 {strides = array<i32>} : memref<1x2x128xf32, #tpu.memory_space<vmem>>, vector<1x2x128xf32>,
    %398 = vector.shape_cast %195 : vector<2x128xf32> to vector<1x2x128xf32>
    %c0_117 = arith.constant 0 : index
    %c0_118 = arith.constant 0 : index
    %c0_119 = arith.constant 0 : index
    %399 = vector.load %arg7[%c0_117, %c0_118, %c0_119] : memref<1x2x128xf32, #tpu.memory_space<vmem>>, vector<1x2x128xf32>
    tpu.vector_store %arg7[%c0_117, %c0_118, %c0_119], %398 {strides = array<i32>} : memref<1x2x128xf32, #tpu.memory_space<vmem>>, vector<1x2x128xf32>,
    return
  }
  func.func @transform_0(%arg0: i32) -> (i32, i32, i32) {
    %c0_i32 = arith.constant 0 : i32
    %c0_i32_0 = arith.constant 0 : i32
    %c0_i32_1 = arith.constant 0 : i32
    return %c0_i32, %c0_i32_0, %arg0 : i32, i32, i32
  }
  func.func @transform_1(%arg0: i32) -> (i32, i32, i32) {
    %c0_i32 = arith.constant 0 : i32
    %c0_i32_0 = arith.constant 0 : i32
    %c0_i32_1 = arith.constant 0 : i32
    return %c0_i32, %c0_i32_0, %arg0 : i32, i32, i32
  }
  func.func @transform_2(%arg0: i32) -> (i32, i32) {
    %c0_i32 = arith.constant 0 : i32
    %c0_i32_0 = arith.constant 0 : i32
    return %c0_i32, %arg0 : i32, i32
  }
  func.func @transform_3(%arg0: i32) -> (i32, i32) {
    %c0_i32 = arith.constant 0 : i32
    %c0_i32_0 = arith.constant 0 : i32
    return %c0_i32, %arg0 : i32, i32
  }
  func.func @transform_4(%arg0: i32) -> (i32, i32) {
    %c0_i32 = arith.constant 0 : i32
    %c0_i32_0 = arith.constant 0 : i32
    return %c0_i32, %arg0 : i32, i32
  }
  func.func @transform_5(%arg0: i32) -> (i32, i32, i32, i32) {
    %c0_i32 = arith.constant 0 : i32
    %c0_i32_0 = arith.constant 0 : i32
    %c0_i32_1 = arith.constant 0 : i32
    %c0_i32_2 = arith.constant 0 : i32
    return %c0_i32, %c0_i32_0, %c0_i32_1, %arg0 : i32, i32, i32, i32
  }
  func.func @transform_6(%arg0: i32) -> (i32, i32, i32) {
    %c0_i32 = arith.constant 0 : i32
    %c0_i32_0 = arith.constant 0 : i32
    %c0_i32_1 = arith.constant 0 : i32
    return %arg0, %c0_i32, %c0_i32_0 : i32, i32, i32
  }
  func.func @transform_7(%arg0: i32) -> (i32, i32, i32) {
    %c0_i32 = arith.constant 0 : i32
    %c0_i32_0 = arith.constant 0 : i32
    %c0_i32_1 = arith.constant 0 : i32
    return %arg0, %c0_i32, %c0_i32_0 : i32, i32, i32
  }
}

</mosaic_0001>

<llo_original>
// kernel: tpu_custom_call.1
$region0: #{tpu_custom_call.1}
  #allocation0 [shape = 'u32[]', space=smem, size = 0x4, offset = 0x4, fixed_abs, tag = 'smem constant byte address 0x4 - core index']
  #allocation1 [shape = 'u32[72,128]{1,0:T(1,128)}', space=vmem, size = 0x9000, scoped, tag = 'internal scratch']
  %s0 = inlined_call_operand.vmem [shape: f32[4,2,128], index: 0, kind: input, shape index: {}]
  %s1 = inlined_call_operand.vmem [shape: f32[4,2,128], index: 1, kind: input, shape index: {}]
  %s2 = inlined_call_operand.vmem [shape: f32[2,128], index: 2, kind: input, shape index: {}]
  %s3 = inlined_call_operand.vmem [shape: f32[2,128], index: 3, kind: input, shape index: {}]
  %s4 = inlined_call_operand.vmem [shape: f32[2,128], index: 4, kind: input, shape index: {}]
  %s5 = inlined_call_operand.vmem [shape: f32[4,2,17,128], index: 5, kind: input, shape index: {}]
  %s6 = inlined_call_operand.hbm [shape: f32[1,2,128], index: 6, kind: output, shape index: {0}]
  %s7 = inlined_call_operand.hbm [shape: f32[1,2,128], index: 7, kind: output, shape index: {1}]
  %8 = xla_tuple %s6, %s7
  %s9 = sld [smem:[#allocation0]]
  $region42: #{tpu_custom_call.1} parent=0
    _
  %s11 = ssub.s32 1, %s9
  %s12 = scalar_select 0, %s11, %s9
  $region1: #{tpu_custom_call.1} parent=0
    #allocation2 [shape = 'u8[1024]{0}', space=vmem, size = 0x400, scoped, tag = 'output window, operand 0, single buffered']
    #allocation3 [shape = 's32[1]{0}', space=sflag, size = 0x4, scoped, tag = 'scoped memory for tpu_custom_call.1']
    #allocation4 [shape = 'u8[1024]{0}', space=vmem, size = 0x400, scoped, tag = 'output window, operand 1, single buffered']
    #allocation5 [shape = 's32[1]{0}', space=sflag, size = 0x4, scoped, tag = 'scoped memory for tpu_custom_call.1']
    %13 = vsyncpa [#allocation3], 0
    %14 = vsyncpa [#allocation5], 0
    // Predicated region
    $region2: #{tpu_custom_call.1} parent=1 // pred_check
      _
    $region3: #{tpu_custom_call.1} parent=1 // pred_check_branch
      %16 = sbr.rel (0) target = $region5
    $region4: #{tpu_custom_call.1} parent=1 // pred_region
      _
    $region5: #{tpu_custom_call.1} parent=1 // pred_fallthru
      _
    // Predicated region
    $region6: #{tpu_custom_call.1} parent=1 // pred_check
      _
    $region7: #{tpu_custom_call.1} parent=1 // pred_check_branch
      %18 = sbr.rel (0) target = $region9
    $region8: #{tpu_custom_call.1} parent=1 // pred_region
      _
    $region9: #{tpu_custom_call.1} parent=1 // pred_fallthru
      _
    // Predicated region
    $region10: #{tpu_custom_call.1} parent=1 // pred_check
      _
    $region11: #{tpu_custom_call.1} parent=1 // pred_check_branch
      %20 = sbr.rel (0) target = $region13
    $region12: #{tpu_custom_call.1} parent=1 // pred_region
      _
    $region13: #{tpu_custom_call.1} parent=1 // pred_fallthru
      _
    // Predicated region
    $region14: #{tpu_custom_call.1} parent=1 // pred_check
      _
    $region15: #{tpu_custom_call.1} parent=1 // pred_check_branch
      %22 = sbr.rel (0) target = $region17
    $region16: #{tpu_custom_call.1} parent=1 // pred_region
      _
    $region17: #{tpu_custom_call.1} parent=1 // pred_fallthru
      _
    // Predicated region
    $region18: #{tpu_custom_call.1} parent=1 // pred_check
      _
    $region19: #{tpu_custom_call.1} parent=1 // pred_check_branch
      %24 = sbr.rel (0) target = $region21
    $region20: #{tpu_custom_call.1} parent=1 // pred_region
      _
    $region21: #{tpu_custom_call.1} parent=1 // pred_fallthru
      _
    // Predicated region
    $region22: #{tpu_custom_call.1} parent=1 // pred_check
      _
    $region23: #{tpu_custom_call.1} parent=1 // pred_check_branch
      %26 = sbr.rel (0) target = $region25
    $region24: #{tpu_custom_call.1} parent=1 // pred_region
      _
    $region25: #{tpu_custom_call.1} parent=1 // pred_fallthru
      _
    %v27 = vld [vmem:[%s0] sm:$0x3]
    %s28 = sadd.s32 0, 2
    %s29 = scalar_lea.vmem %s0, %s28
    %v30 = vld [vmem:[%s29] sm:$0x3]
    %s31 = sadd.s32 0, 4
    %s32 = scalar_lea.vmem %s0, %s31
    %v33 = vld [vmem:[%s32] sm:$0x3]
    %s34 = sadd.s32 0, 6
    %s35 = scalar_lea.vmem %s0, %s34
    %v36 = vld [vmem:[%s35] sm:$0x3]
    %v37 = vld [vmem:[%s1] sm:$0x3]
    %s38 = scalar_lea.vmem %s1, %s28
    %v39 = vld [vmem:[%s38] sm:$0x3]
    %s40 = scalar_lea.vmem %s1, %s31
    %v41 = vld [vmem:[%s40] sm:$0x3]
    %s42 = scalar_lea.vmem %s1, %s34
    %v43 = vld [vmem:[%s42] sm:$0x3]
    %v44 = vld [vmem:[%s3] sm:$0x3]
    %vm45 = vcmp.gt.f32.partialorder %v44, 0.0
    %v46 = vld [vmem:[%s2] sm:$0x3]
    %v47 = vsub.f32 %v33, %v27
    %v48 = vsub.f32 %v36, %v30
    %v49 = vadd.f32 %v48, 1e-07
    %v50 = vsub.f32 %v41, %v37
    %v51 = vsub.f32 %v43, %v39
    %v52 = vadd.f32 %v51, 1e-07
    %v53 = vmin.f32 %v33, %v41
    %v54 = vmax.f32 %v27, %v37
    %v55 = vsub.f32 %v53, %v54
    %v56 = vmax.f32 %v55, 0.0
    %v57 = vmin.f32 %v36, %v43
    %v58 = vmax.f32 %v30, %v39
    %v59 = vsub.f32 %v57, %v58
    %v60 = vmax.f32 %v59, 0.0
    %v61 = vmul.f32 %v56, %v60
    %v62 = vmul.f32 %v47, %v49
    %v63 = vmul.f32 %v50, %v52
    %v64 = vadd.f32 %v62, %v63
    %v65 = vsub.f32 %v64, %v61
    %v66 = vadd.f32 %v65, 1e-07
    %v67 = vrcp.pop %v66
    %v68 = vmul.f32 %v61, %v67
    %v69 = vmax.f32 %v33, %v41
    %v70 = vmin.f32 %v27, %v37
    %v71 = vsub.f32 %v69, %v70
    %v72 = vmax.f32 %v36, %v43
    %v73 = vmin.f32 %v30, %v39
    %v74 = vsub.f32 %v72, %v73
    %v75 = vmul.f32 %v71, %v71
    %v76 = vmul.f32 %v74, %v74
    %v77 = vadd.f32 %v75, %v76
    %v78 = vadd.f32 %v77, 1e-07
    %v79 = vadd.f32 %v37, %v41
    %v80 = vsub.f32 %v79, %v27
    %v81 = vsub.f32 %v80, %v33
    %v82 = vmul.f32 %v81, %v81
    %v83 = vadd.f32 %v39, %v43
    %v84 = vsub.f32 %v83, %v30
    %v85 = vsub.f32 %v84, %v36
    %v86 = vmul.f32 %v85, %v85
    %v87 = vadd.f32 %v82, %v86
    %v88 = vmul.f32 %v87, 0.25
    %v89 = vrcp.pop %v52
    %v90 = vmul.f32 %v50, %v89
    %v91 = vand.u32 2147483647, %v90
    %vm92 = vcmp.gt.f32.partialorder %v91, 2.4142137
    %vm93 = vcmp.gt.f32.partialorder %v91, 0.41421357
    %vm94 = vmxor %vm92, 1
    %vm95 = vmand %vm93, %vm94
    %v96 = vadd.f32 %v91, 1e-30
    %v97 = vrcp.pop %v96
    %v98 = vsub.f32 0.0, %v97
    %v99 = vsub.f32 %v91, 1.0
    %v100 = vadd.f32 %v91, 1.0
    %v101 = vrcp.pop %v100
    %v102 = vmul.f32 %v99, %v101
    %v103 = vsel %vm95, %v102, %v91
    %v104 = vsel %vm92, %v98, %v103
    %v105 = vsel %vm95, 0.7853982, 0.0
    %v106 = vsel %vm92, 1.5707964, %v105
    %v107 = vmul.f32 %v104, %v104
    %v108 = vmul.f32 %v107, 0.080537446
    %v109 = vsub.f32 %v108, 0.13877685
    %v110 = vmul.f32 %v109, %v107
    %v111 = vadd.f32 %v110, 0.19977711
    %v112 = vmul.f32 %v111, %v107
    %v113 = vsub.f32 %v112, 0.3333295
    %v114 = vmul.f32 %v113, %v107
    %v115 = vmul.f32 %v114, %v104
    %v116 = vadd.f32 %v106, %v115
    %v117 = vadd.f32 %v116, %v104
    %vm118 = vcmp.lt.f32.partialorder %v90, 0.0
    %v119 = vsub.f32 0.0, %v117
    %v120 = vsel %vm118, %v119, %v117
    %v121 = vrcp.pop %v49
    %v122 = vmul.f32 %v47, %v121
    %v123 = vand.u32 2147483647, %v122
    %vm124 = vcmp.gt.f32.partialorder %v123, 2.4142137
    %vm125 = vcmp.gt.f32.partialorder %v123, 0.41421357
    %vm126 = vmxor %vm124, 1
    %vm127 = vmand %vm125, %vm126
    %v128 = vadd.f32 %v123, 1e-30
    %v129 = vrcp.pop %v128
    %v130 = vsub.f32 0.0, %v129
    %v131 = vsub.f32 %v123, 1.0
    %v132 = vadd.f32 %v123, 1.0
    %v133 = vrcp.pop %v132
    %v134 = vmul.f32 %v131, %v133
    %v135 = vsel %vm127, %v134, %v123
    %v136 = vsel %vm124, %v130, %v135
    %v137 = vsel %vm127, 0.7853982, 0.0
    %v138 = vsel %vm124, 1.5707964, %v137
    %v139 = vmul.f32 %v136, %v136
    %v140 = vmul.f32 %v139, 0.080537446
    %v141 = vsub.f32 %v140, 0.13877685
    %v142 = vmul.f32 %v141, %v139
    %v143 = vadd.f32 %v142, 0.19977711
    %v144 = vmul.f32 %v143, %v139
    %v145 = vsub.f32 %v144, 0.3333295
    %v146 = vmul.f32 %v145, %v139
    %v147 = vmul.f32 %v146, %v136
    %v148 = vadd.f32 %v138, %v147
    %v149 = vadd.f32 %v148, %v136
    %vm150 = vcmp.lt.f32.partialorder %v122, 0.0
    %v151 = vsub.f32 0.0, %v149
    %v152 = vsel %vm150, %v151, %v149
    %v153 = vsub.f32 %v120, %v152
    %v154 = vmul.f32 %v153, %v153
    %v155 = vmul.f32 %v154, 0.40528473
    %v156 = vsub.f32 %v155, %v68
    %v157 = vadd.f32 %v156, 1.0000001
    %v158 = vrcp.pop %v157
    %v159 = vmul.f32 %v155, %v158
    %v160 = vrcp.pop %v78
    %v161 = vmul.f32 %v88, %v160
    %v162 = vmul.f32 %v155, %v159
    %v163 = vadd.f32 %v161, %v162
    %v164 = vsub.f32 %v68, %v163
    %v165 = vsub.f32 1.0, %v164
    %v166 = vmul.f32 %v165, %v46
    %v167 = vsel %vm45, %v166, 0.0
    %v168 = vadd.f32 %v167, 0.0
    %v169 = vld [vmem:[%s4] sm:$0x3]
    %v170 = vperm.slane %v169, 0
    %v171 = vsub.f32 %v170, %v37
    %v172 = vperm.slane %v169, 1
    %v173 = vsub.f32 %v172, %v39
    %v174 = vsub.f32 %v41, %v170
    %v175 = vsub.f32 %v43, %v172
    %v176 = vlaneseq
    %v177 = vshrl.u32 %v176, 7
    %v178 = vadd.s32 %v177, 8
    %v179 = vadd.s32 %v177, 16
    %v180 = vmax.f32 %v171, 0.0
    %v181 = vmin.f32 %v180, 15.99
    %v182 = vfloor.f32 %v181
    %v183 = vcvt.f32.s32.to.zero.pseudo %v182
    %v184 = vadd.f32 %v182, 1.0
    %v185 = vsub.f32 %v184, %v181
    %v186 = vsub.f32 1.0, %v185
    %v187 = vld [vmem:[%s5] sm:$0xff]
    %v188 = vld [vmem:[%s5 + $0x8] sm:$0xff]
    %v189 = vld [vmem:[%s5 + $0x10] sm:$0x1]
    %v190 = vld [vmem:[%s5 + $0x18] sm:$0xff]
    %v191 = vld [vmem:[%s5 + $0x20] sm:$0xff]
    %v192 = vld [vmem:[%s5 + $0x28] sm:$0x1]
    %vm193 = vcmask 1040384
    %v194 = vsel %vm193, %v189, -inf
    %v195 = vmax.f32 %v187, %v194
    %v196 = vmax.f32 %v195, %v188
    %v197 = vrot.slane %v196, 4
    %v198 = vmax.f32 %v196, %v197
    %v199 = vrot.slane %v198, 2
    %v200 = vmax.f32 %v198, %v199
    %v201 = vrot.slane %v200, 1
    %v202 = vmax.f32 %v200, %v201
    %v203 = vsel %vm193, %v192, -inf
    %v204 = vmax.f32 %v190, %v203
    %v205 = vmax.f32 %v204, %v191
    %v206 = vrot.slane %v205, 4
    %v207 = vmax.f32 %v205, %v206
    %v208 = vrot.slane %v207, 2
    %v209 = vmax.f32 %v207, %v208
    %v210 = vrot.slane %v209, 1
    %v211 = vmax.f32 %v209, %v210
    %v212 = vsub.f32 %v187, %v202
    %v213 = vsub.f32 %v188, %v202
    %v214 = vsub.f32 %v189, %v202
    %v215 = vsub.f32 %v190, %v211
    %v216 = vsub.f32 %v191, %v211
    %v217 = vsub.f32 %v192, %v211
    %v218 = vmul.f32 %v212, 1.442695
    %v219 = vpow.pop %v218
    %v220 = vmul.f32 %v213, 1.442695
    %v221 = vpow.pop %v220
    %v222 = vmul.f32 %v214, 1.442695
    %v223 = vpow.pop %v222
    %v224 = vmul.f32 %v215, 1.442695
    %v225 = vpow.pop %v224
    %v226 = vmul.f32 %v216, 1.442695
    %v227 = vpow.pop %v226
    %v228 = vmul.f32 %v217, 1.442695
    %v229 = vpow.pop %v228
    %v230 = vadd.f32 %v219, %v221
    %v231 = vsel %vm193, %v223, 0.0
    %v232 = vadd.f32 %v230, %v231
    %v233 = vrot.slane %v232, 4
    %v234 = vadd.f32 %v232, %v233
    %v235 = vrot.slane %v234, 2
    %v236 = vadd.f32 %v234, %v235
    %v237 = vrot.slane %v236, 1
    %v238 = vadd.f32 %v236, %v237
    %v239 = vadd.f32 %v225, %v227
    %v240 = vsel %vm193, %v229, 0.0
    %v241 = vadd.f32 %v239, %v240
    %v242 = vrot.slane %v241, 4
    %v243 = vadd.f32 %v241, %v242
    %v244 = vrot.slane %v243, 2
    %v245 = vadd.f32 %v243, %v244
    %v246 = vrot.slane %v245, 1
    %v247 = vadd.f32 %v245, %v246
    %v248 = vlog2.pop %v238
    %v249 = vmul.f32 %v248, 0.6931472
    %v250 = vlog2.pop %v247
    %v251 = vmul.f32 %v250, 0.6931472
    %v252 = vadd.f32 %v202, %v249
    %v253 = vadd.f32 %v211, %v251
    %v254 = vrot.slane %v183, 1
    %v255 = vperm.slane %v183, 0
    %v256 = vperm.slane %v254, 0
    %vm257 = vcmp.eq.s32.totalorder %v177, %v255
    %vm258 = vcmp.eq.s32.totalorder %v178, %v255
    %vm259 = vcmp.eq.s32.totalorder %v179, %v255
    %vm260 = vcmp.eq.s32.totalorder %v177, %v256
    %vm261 = vcmp.eq.s32.totalorder %v178, %v256
    %vm262 = vcmp.eq.s32.totalorder %v179, %v256
    %v264 = vrot.slane %v185, 1
    %v265 = vperm.slane %v185, 0
    %v266 = vperm.slane %v264, 0
    %v269 = vsel %vm257, %v265, 0.0
    %v270 = vsel %vm258, %v265, 0.0
    %v271 = vsel %vm259, %v265, 0.0
    %v272 = vsel %vm260, %v266, 0.0
    %v273 = vsel %vm261, %v266, 0.0
    %v274 = vsel %vm262, %v266, 0.0
    %v275 = vadd.s32 %v183, 1
    %v276 = vadd.s32 %v254, 1
    %v277 = vperm.slane %v275, 0
    %v278 = vperm.slane %v276, 0
    %vm279 = vcmp.eq.s32.totalorder %v177, %v277
    %vm280 = vcmp.eq.s32.totalorder %v178, %v277
    %vm281 = vcmp.eq.s32.totalorder %v179, %v277
    %vm282 = vcmp.eq.s32.totalorder %v177, %v278
    %vm283 = vcmp.eq.s32.totalorder %v178, %v278
    %vm284 = vcmp.eq.s32.totalorder %v179, %v278
    %v286 = vrot.slane %v186, 1
    %v287 = vperm.slane %v186, 0
    %v288 = vperm.slane %v286, 0
    %v291 = vsel %vm279, %v287, 0.0
    %v292 = vsel %vm280, %v287, 0.0
    %v293 = vsel %vm281, %v287, 0.0
    %v294 = vsel %vm282, %v288, 0.0
    %v295 = vsel %vm283, %v288, 0.0
    %v296 = vsel %vm284, %v288, 0.0
    %v297 = vadd.f32 %v269, %v291
    %v298 = vadd.f32 %v270, %v292
    %v299 = vadd.f32 %v271, %v293
    %v300 = vadd.f32 %v272, %v294
    %v301 = vadd.f32 %v273, %v295
    %v302 = vadd.f32 %v274, %v296
    %v303 = vmul.f32 %v187, %v297
    %v304 = vmul.f32 %v188, %v298
    %v305 = vmul.f32 %v189, %v299
    %v306 = vmul.f32 %v190, %v300
    %v307 = vmul.f32 %v191, %v301
    %v308 = vmul.f32 %v192, %v302
    %v309 = vadd.f32 %v303, %v304
    %v310 = vsel %vm193, %v305, 0.0
    %v311 = vadd.f32 %v309, %v310
    %v312 = vrot.slane %v311, 4
    %v313 = vadd.f32 %v311, %v312
    %v314 = vrot.slane %v313, 2
    %v315 = vadd.f32 %v313, %v314
    %v316 = vrot.slane %v315, 1
    %v317 = vadd.f32 %v315, %v316
    %v318 = vadd.f32 %v306, %v307
    %v319 = vsel %vm193, %v308, 0.0
    %v320 = vadd.f32 %v318, %v319
    %v321 = vrot.slane %v320, 4
    %v322 = vadd.f32 %v320, %v321
    %v323 = vrot.slane %v322, 2
    %v324 = vadd.f32 %v322, %v323
    %v325 = vrot.slane %v324, 1
    %v326 = vadd.f32 %v324, %v325
    %v327 = vsub.f32 %v252, %v317
    %v328 = vsub.f32 %v253, %v326
    %v329 = vadd.f32 %v327, 0.0
    %v330 = vadd.f32 %v328, 0.0
    %v331 = vmax.f32 %v173, 0.0
    %v332 = vmin.f32 %v331, 15.99
    %v333 = vfloor.f32 %v332
    %v334 = vcvt.f32.s32.to.zero.pseudo %v333
    %v335 = vadd.f32 %v333, 1.0
    %v336 = vsub.f32 %v335, %v332
    %v337 = vsub.f32 1.0, %v336
    %s338 = sadd.s32 0, 48
    %s339 = scalar_lea.vmem %s5, %s338
    %v340 = vld [vmem:[%s339] sm:$0xff]
    %v341 = vld [vmem:[%s339 + $0x8] sm:$0xff]
    %v342 = vld [vmem:[%s339 + $0x10] sm:$0x1]
    %v343 = vld [vmem:[%s339 + $0x18] sm:$0xff]
    %v344 = vld [vmem:[%s339 + $0x20] sm:$0xff]
    %v345 = vld [vmem:[%s339 + $0x28] sm:$0x1]
    %v346 = vsel %vm193, %v342, -inf
    %v347 = vmax.f32 %v340, %v346
    %v348 = vmax.f32 %v347, %v341
    %v349 = vrot.slane %v348, 4
    %v350 = vmax.f32 %v348, %v349
    %v351 = vrot.slane %v350, 2
    %v352 = vmax.f32 %v350, %v351
    %v353 = vrot.slane %v352, 1
    %v354 = vmax.f32 %v352, %v353
    %v355 = vsel %vm193, %v345, -inf
    %v356 = vmax.f32 %v343, %v355
    %v357 = vmax.f32 %v356, %v344
    %v358 = vrot.slane %v357, 4
    %v359 = vmax.f32 %v357, %v358
    %v360 = vrot.slane %v359, 2
    %v361 = vmax.f32 %v359, %v360
    %v362 = vrot.slane %v361, 1
    %v363 = vmax.f32 %v361, %v362
    %v364 = vsub.f32 %v340, %v354
    %v365 = vsub.f32 %v341, %v354
    %v366 = vsub.f32 %v342, %v354
    %v367 = vsub.f32 %v343, %v363
    %v368 = vsub.f32 %v344, %v363
    %v369 = vsub.f32 %v345, %v363
    %v370 = vmul.f32 %v364, 1.442695
    %v371 = vpow.pop %v370
    %v372 = vmul.f32 %v365, 1.442695
    %v373 = vpow.pop %v372
    %v374 = vmul.f32 %v366, 1.442695
    %v375 = vpow.pop %v374
    %v376 = vmul.f32 %v367, 1.442695
    %v377 = vpow.pop %v376
    %v378 = vmul.f32 %v368, 1.442695
    %v379 = vpow.pop %v378
    %v380 = vmul.f32 %v369, 1.442695
    %v381 = vpow.pop %v380
    %v382 = vadd.f32 %v371, %v373
    %v383 = vsel %vm193, %v375, 0.0
    %v384 = vadd.f32 %v382, %v383
    %v385 = vrot.slane %v384, 4
    %v386 = vadd.f32 %v384, %v385
    %v387 = vrot.slane %v386, 2
    %v388 = vadd.f32 %v386, %v387
    %v389 = vrot.slane %v388, 1
    %v390 = vadd.f32 %v388, %v389
    %v391 = vadd.f32 %v377, %v379
    %v392 = vsel %vm193, %v381, 0.0
    %v393 = vadd.f32 %v391, %v392
    %v394 = vrot.slane %v393, 4
    %v395 = vadd.f32 %v393, %v394
    %v396 = vrot.slane %v395, 2
    %v397 = vadd.f32 %v395, %v396
    %v398 = vrot.slane %v397, 1
    %v399 = vadd.f32 %v397, %v398
    %v400 = vlog2.pop %v390
    %v401 = vmul.f32 %v400, 0.6931472
    %v402 = vlog2.pop %v399
    %v403 = vmul.f32 %v402, 0.6931472
    %v404 = vadd.f32 %v354, %v401
    %v405 = vadd.f32 %v363, %v403
    %v406 = vrot.slane %v334, 1
    %v407 = vperm.slane %v334, 0
    %v408 = vperm.slane %v406, 0
    %vm409 = vcmp.eq.s32.totalorder %v177, %v407
    %vm410 = vcmp.eq.s32.totalorder %v178, %v407
    %vm411 = vcmp.eq.s32.totalorder %v179, %v407
    %vm412 = vcmp.eq.s32.totalorder %v177, %v408
    %vm413 = vcmp.eq.s32.totalorder %v178, %v408
    %vm414 = vcmp.eq.s32.totalorder %v179, %v408
    %v416 = vrot.slane %v336, 1
    %v417 = vperm.slane %v336, 0
    %v418 = vperm.slane %v416, 0
    %v421 = vsel %vm409, %v417, 0.0
    %v422 = vsel %vm410, %v417, 0.0
    %v423 = vsel %vm411, %v417, 0.0
    %v424 = vsel %vm412, %v418, 0.0
    %v425 = vsel %vm413, %v418, 0.0
    %v426 = vsel %vm414, %v418, 0.0
    %v427 = vadd.s32 %v334, 1
    %v428 = vadd.s32 %v406, 1
    %v429 = vperm.slane %v427, 0
    %v430 = vperm.slane %v428, 0
    %vm431 = vcmp.eq.s32.totalorder %v177, %v429
    %vm432 = vcmp.eq.s32.totalorder %v178, %v429
    %vm433 = vcmp.eq.s32.totalorder %v179, %v429
    %vm434 = vcmp.eq.s32.totalorder %v177, %v430
    %vm435 = vcmp.eq.s32.totalorder %v178, %v430
    %vm436 = vcmp.eq.s32.totalorder %v179, %v430
    %v438 = vrot.slane %v337, 1
    %v439 = vperm.slane %v337, 0
    %v440 = vperm.slane %v438, 0
    %v443 = vsel %vm431, %v439, 0.0
    %v444 = vsel %vm432, %v439, 0.0
    %v445 = vsel %vm433, %v439, 0.0
    %v446 = vsel %vm434, %v440, 0.0
    %v447 = vsel %vm435, %v440, 0.0
    %v448 = vsel %vm436, %v440, 0.0
    %v449 = vadd.f32 %v421, %v443
    %v450 = vadd.f32 %v422, %v444
    %v451 = vadd.f32 %v423, %v445
    %v452 = vadd.f32 %v424, %v446
    %v453 = vadd.f32 %v425, %v447
    %v454 = vadd.f32 %v426, %v448
    %v455 = vmul.f32 %v340, %v449
    %v456 = vmul.f32 %v341, %v450
    %v457 = vmul.f32 %v342, %v451
    %v458 = vmul.f32 %v343, %v452
    %v459 = vmul.f32 %v344, %v453
    %v460 = vmul.f32 %v345, %v454
    %v461 = vadd.f32 %v455, %v456
    %v462 = vsel %vm193, %v457, 0.0
    %v463 = vadd.f32 %v461, %v462
    %v464 = vrot.slane %v463, 4
    %v465 = vadd.f32 %v463, %v464
    %v466 = vrot.slane %v465, 2
    %v467 = vadd.f32 %v465, %v466
    %v468 = vrot.slane %v467, 1
    %v469 = vadd.f32 %v467, %v468
    %v470 = vadd.f32 %v458, %v459
    %v471 = vsel %vm193, %v460, 0.0
    %v472 = vadd.f32 %v470, %v471
    %v473 = vrot.slane %v472, 4
    %v474 = vadd.f32 %v472, %v473
    %v475 = vrot.slane %v474, 2
    %v476 = vadd.f32 %v474, %v475
    %v477 = vrot.slane %v476, 1
    %v478 = vadd.f32 %v476, %v477
    %v479 = vsub.f32 %v404, %v469
    %v480 = vsub.f32 %v405, %v478
    %v481 = vadd.f32 %v329, %v479
    %v482 = vadd.f32 %v330, %v480
    %v483 = vmax.f32 %v174, 0.0
    %v484 = vmin.f32 %v483, 15.99
    %v485 = vfloor.f32 %v484
    %v486 = vcvt.f32.s32.to.zero.pseudo %v485
    %v487 = vadd.f32 %v485, 1.0
    %v488 = vsub.f32 %v487, %v484
    %v489 = vsub.f32 1.0, %v488
    %s490 = sadd.s32 0, 96
    %s491 = scalar_lea.vmem %s5, %s490
    %v492 = vld [vmem:[%s491] sm:$0xff]
    %v493 = vld [vmem:[%s491 + $0x8] sm:$0xff]
    %v494 = vld [vmem:[%s491 + $0x10] sm:$0x1]
    %v495 = vld [vmem:[%s491 + $0x18] sm:$0xff]
    %v496 = vld [vmem:[%s491 + $0x20] sm:$0xff]
    %v497 = vld [vmem:[%s491 + $0x28] sm:$0x1]
    %v498 = vsel %vm193, %v494, -inf
    %v499 = vmax.f32 %v492, %v498
    %v500 = vmax.f32 %v499, %v493
    %v501 = vrot.slane %v500, 4
    %v502 = vmax.f32 %v500, %v501
    %v503 = vrot.slane %v502, 2
    %v504 = vmax.f32 %v502, %v503
    %v505 = vrot.slane %v504, 1
    %v506 = vmax.f32 %v504, %v505
    %v507 = vsel %vm193, %v497, -inf
    %v508 = vmax.f32 %v495, %v507
    %v509 = vmax.f32 %v508, %v496
    %v510 = vrot.slane %v509, 4
    %v511 = vmax.f32 %v509, %v510
    %v512 = vrot.slane %v511, 2
    %v513 = vmax.f32 %v511, %v512
    %v514 = vrot.slane %v513, 1
    %v515 = vmax.f32 %v513, %v514
    %v516 = vsub.f32 %v492, %v506
    %v517 = vsub.f32 %v493, %v506
    %v518 = vsub.f32 %v494, %v506
    %v519 = vsub.f32 %v495, %v515
    %v520 = vsub.f32 %v496, %v515
    %v521 = vsub.f32 %v497, %v515
    %v522 = vmul.f32 %v516, 1.442695
    %v523 = vpow.pop %v522
    %v524 = vmul.f32 %v517, 1.442695
    %v525 = vpow.pop %v524
    %v526 = vmul.f32 %v518, 1.442695
    %v527 = vpow.pop %v526
    %v528 = vmul.f32 %v519, 1.442695
    %v529 = vpow.pop %v528
    %v530 = vmul.f32 %v520, 1.442695
    %v531 = vpow.pop %v530
    %v532 = vmul.f32 %v521, 1.442695
    %v533 = vpow.pop %v532
    %v534 = vadd.f32 %v523, %v525
    %v535 = vsel %vm193, %v527, 0.0
    %v536 = vadd.f32 %v534, %v535
    %v537 = vrot.slane %v536, 4
    %v538 = vadd.f32 %v536, %v537
    %v539 = vrot.slane %v538, 2
    %v540 = vadd.f32 %v538, %v539
    %v541 = vrot.slane %v540, 1
    %v542 = vadd.f32 %v540, %v541
    %v543 = vadd.f32 %v529, %v531
    %v544 = vsel %vm193, %v533, 0.0
    %v545 = vadd.f32 %v543, %v544
    %v546 = vrot.slane %v545, 4
    %v547 = vadd.f32 %v545, %v546
    %v548 = vrot.slane %v547, 2
    %v549 = vadd.f32 %v547, %v548
    %v550 = vrot.slane %v549, 1
    %v551 = vadd.f32 %v549, %v550
    %v552 = vlog2.pop %v542
    %v553 = vmul.f32 %v552, 0.6931472
    %v554 = vlog2.pop %v551
    %v555 = vmul.f32 %v554, 0.6931472
    %v556 = vadd.f32 %v506, %v553
    %v557 = vadd.f32 %v515, %v555
    %v558 = vrot.slane %v486, 1
    %v559 = vperm.slane %v486, 0
    %v560 = vperm.slane %v558, 0
    %vm561 = vcmp.eq.s32.totalorder %v177, %v559
    %vm562 = vcmp.eq.s32.totalorder %v178, %v559
    %vm563 = vcmp.eq.s32.totalorder %v179, %v559
    %vm564 = vcmp.eq.s32.totalorder %v177, %v560
    %vm565 = vcmp.eq.s32.totalorder %v178, %v560
    %vm566 = vcmp.eq.s32.totalorder %v179, %v560
    %v568 = vrot.slane %v488, 1
    %v569 = vperm.slane %v488, 0
    %v570 = vperm.slane %v568, 0
    %v573 = vsel %vm561, %v569, 0.0
    %v574 = vsel %vm562, %v569, 0.0
    %v575 = vsel %vm563, %v569, 0.0
    %v576 = vsel %vm564, %v570, 0.0
    %v577 = vsel %vm565, %v570, 0.0
    %v578 = vsel %vm566, %v570, 0.0
    %v579 = vadd.s32 %v486, 1
    %v580 = vadd.s32 %v558, 1
    %v581 = vperm.slane %v579, 0
    %v582 = vperm.slane %v580, 0
    %vm583 = vcmp.eq.s32.totalorder %v177, %v581
    %vm584 = vcmp.eq.s32.totalorder %v178, %v581
    %vm585 = vcmp.eq.s32.totalorder %v179, %v581
    %vm586 = vcmp.eq.s32.totalorder %v177, %v582
    %vm587 = vcmp.eq.s32.totalorder %v178, %v582
    %vm588 = vcmp.eq.s32.totalorder %v179, %v582
    %v590 = vrot.slane %v489, 1
    %v591 = vperm.slane %v489, 0
    %v592 = vperm.slane %v590, 0
    %v595 = vsel %vm583, %v591, 0.0
    %v596 = vsel %vm584, %v591, 0.0
    %v597 = vsel %vm585, %v591, 0.0
    %v598 = vsel %vm586, %v592, 0.0
    %v599 = vsel %vm587, %v592, 0.0
    %v600 = vsel %vm588, %v592, 0.0
    %v601 = vadd.f32 %v573, %v595
    %v602 = vadd.f32 %v574, %v596
    %v603 = vadd.f32 %v575, %v597
    %v604 = vadd.f32 %v576, %v598
    %v605 = vadd.f32 %v577, %v599
    %v606 = vadd.f32 %v578, %v600
    %v607 = vmul.f32 %v492, %v601
    %v608 = vmul.f32 %v493, %v602
    %v609 = vmul.f32 %v494, %v603
    %v610 = vmul.f32 %v495, %v604
    %v611 = vmul.f32 %v496, %v605
    %v612 = vmul.f32 %v497, %v606
    %v613 = vadd.f32 %v607, %v608
    %v614 = vsel %vm193, %v609, 0.0
    %v615 = vadd.f32 %v613, %v614
    %v616 = vrot.slane %v615, 4
    %v617 = vadd.f32 %v615, %v616
    %v618 = vrot.slane %v617, 2
    %v619 = vadd.f32 %v617, %v618
    %v620 = vrot.slane %v619, 1
    %v621 = vadd.f32 %v619, %v620
    %v622 = vadd.f32 %v610, %v611
    %v623 = vsel %vm193, %v612, 0.0
    %v624 = vadd.f32 %v622, %v623
    %v625 = vrot.slane %v624, 4
    %v626 = vadd.f32 %v624, %v625
    %v627 = vrot.slane %v626, 2
    %v628 = vadd.f32 %v626, %v627
    %v629 = vrot.slane %v628, 1
    %v630 = vadd.f32 %v628, %v629
    %v631 = vsub.f32 %v556, %v621
    %v632 = vsub.f32 %v557, %v630
    %v633 = vadd.f32 %v481, %v631
    %v634 = vadd.f32 %v482, %v632
    %v635 = vmax.f32 %v175, 0.0
    %v636 = vmin.f32 %v635, 15.99
    %v637 = vfloor.f32 %v636
    %v638 = vcvt.f32.s32.to.zero.pseudo %v637
    %v639 = vadd.f32 %v637, 1.0
    %v640 = vsub.f32 %v639, %v636
    %v641 = vsub.f32 1.0, %v640
    %s642 = sadd.s32 0, 144
    %s643 = scalar_lea.vmem %s5, %s642
    %v644 = vld [vmem:[%s643] sm:$0xff]
    %v645 = vld [vmem:[%s643 + $0x8] sm:$0xff]
    %v646 = vld [vmem:[%s643 + $0x10] sm:$0x1]
    %v647 = vld [vmem:[%s643 + $0x18] sm:$0xff]
    %v648 = vld [vmem:[%s643 + $0x20] sm:$0xff]
    %v649 = vld [vmem:[%s643 + $0x28] sm:$0x1]
    %v650 = vsel %vm193, %v646, -inf
    %v651 = vmax.f32 %v644, %v650
    %v652 = vmax.f32 %v651, %v645
    %v653 = vrot.slane %v652, 4
    %v654 = vmax.f32 %v652, %v653
    %v655 = vrot.slane %v654, 2
    %v656 = vmax.f32 %v654, %v655
    %v657 = vrot.slane %v656, 1
    %v658 = vmax.f32 %v656, %v657
    %v659 = vsel %vm193, %v649, -inf
    %v660 = vmax.f32 %v647, %v659
    %v661 = vmax.f32 %v660, %v648
    %v662 = vrot.slane %v661, 4
    %v663 = vmax.f32 %v661, %v662
    %v664 = vrot.slane %v663, 2
    %v665 = vmax.f32 %v663, %v664
    %v666 = vrot.slane %v665, 1
    %v667 = vmax.f32 %v665, %v666
    %v668 = vsub.f32 %v644, %v658
    %v669 = vsub.f32 %v645, %v658
    %v670 = vsub.f32 %v646, %v658
    %v671 = vsub.f32 %v647, %v667
    %v672 = vsub.f32 %v648, %v667
    %v673 = vsub.f32 %v649, %v667
    %v674 = vmul.f32 %v668, 1.442695
    %v675 = vpow.pop %v674
    %v676 = vmul.f32 %v669, 1.442695
    %v677 = vpow.pop %v676
    %v678 = vmul.f32 %v670, 1.442695
    %v679 = vpow.pop %v678
    %v680 = vmul.f32 %v671, 1.442695
    %v681 = vpow.pop %v680
    %v682 = vmul.f32 %v672, 1.442695
    %v683 = vpow.pop %v682
    %v684 = vmul.f32 %v673, 1.442695
    %v685 = vpow.pop %v684
    %v686 = vadd.f32 %v675, %v677
    %v687 = vsel %vm193, %v679, 0.0
    %v688 = vadd.f32 %v686, %v687
    %v689 = vrot.slane %v688, 4
    %v690 = vadd.f32 %v688, %v689
    %v691 = vrot.slane %v690, 2
    %v692 = vadd.f32 %v690, %v691
    %v693 = vrot.slane %v692, 1
    %v694 = vadd.f32 %v692, %v693
    %v695 = vadd.f32 %v681, %v683
    %v696 = vsel %vm193, %v685, 0.0
    %v697 = vadd.f32 %v695, %v696
    %v698 = vrot.slane %v697, 4
    %v699 = vadd.f32 %v697, %v698
    %v700 = vrot.slane %v699, 2
    %v701 = vadd.f32 %v699, %v700
    %v702 = vrot.slane %v701, 1
    %v703 = vadd.f32 %v701, %v702
    %v704 = vlog2.pop %v694
    %v705 = vmul.f32 %v704, 0.6931472
    %v706 = vlog2.pop %v703
    %v707 = vmul.f32 %v706, 0.6931472
    %v708 = vadd.f32 %v658, %v705
    %v709 = vadd.f32 %v667, %v707
    %v710 = vrot.slane %v638, 1
    %v711 = vperm.slane %v638, 0
    %v712 = vperm.slane %v710, 0
    %vm713 = vcmp.eq.s32.totalorder %v177, %v711
    %vm714 = vcmp.eq.s32.totalorder %v178, %v711
    %vm715 = vcmp.eq.s32.totalorder %v179, %v711
    %vm716 = vcmp.eq.s32.totalorder %v177, %v712
    %vm717 = vcmp.eq.s32.totalorder %v178, %v712
    %vm718 = vcmp.eq.s32.totalorder %v179, %v712
    %v720 = vrot.slane %v640, 1
    %v721 = vperm.slane %v640, 0
    %v722 = vperm.slane %v720, 0
    %v725 = vsel %vm713, %v721, 0.0
    %v726 = vsel %vm714, %v721, 0.0
    %v727 = vsel %vm715, %v721, 0.0
    %v728 = vsel %vm716, %v722, 0.0
    %v729 = vsel %vm717, %v722, 0.0
    %v730 = vsel %vm718, %v722, 0.0
    %v731 = vadd.s32 %v638, 1
    %v732 = vadd.s32 %v710, 1
    %v733 = vperm.slane %v731, 0
    %v734 = vperm.slane %v732, 0
    %vm735 = vcmp.eq.s32.totalorder %v177, %v733
    %vm736 = vcmp.eq.s32.totalorder %v178, %v733
    %vm737 = vcmp.eq.s32.totalorder %v179, %v733
    %vm738 = vcmp.eq.s32.totalorder %v177, %v734
    %vm739 = vcmp.eq.s32.totalorder %v178, %v734
    %vm740 = vcmp.eq.s32.totalorder %v179, %v734
    %v742 = vrot.slane %v641, 1
    %v743 = vperm.slane %v641, 0
    %v744 = vperm.slane %v742, 0
    %v747 = vsel %vm735, %v743, 0.0
    %v748 = vsel %vm736, %v743, 0.0
    %v749 = vsel %vm737, %v743, 0.0
    %v750 = vsel %vm738, %v744, 0.0
    %v751 = vsel %vm739, %v744, 0.0
    %v752 = vsel %vm740, %v744, 0.0
    %v753 = vadd.f32 %v725, %v747
    %v754 = vadd.f32 %v726, %v748
    %v755 = vadd.f32 %v727, %v749
    %v756 = vadd.f32 %v728, %v750
    %v757 = vadd.f32 %v729, %v751
    %v758 = vadd.f32 %v730, %v752
    %v759 = vmul.f32 %v644, %v753
    %v760 = vmul.f32 %v645, %v754
    %v761 = vmul.f32 %v646, %v755
    %v762 = vmul.f32 %v647, %v756
    %v763 = vmul.f32 %v648, %v757
    %v764 = vmul.f32 %v649, %v758
    %v765 = vadd.f32 %v759, %v760
    %v766 = vsel %vm193, %v761, 0.0
    %v767 = vadd.f32 %v765, %v766
    %v768 = vrot.slane %v767, 4
    %v769 = vadd.f32 %v767, %v768
    %v770 = vrot.slane %v769, 2
    %v771 = vadd.f32 %v769, %v770
    %v772 = vrot.slane %v771, 1
    %v773 = vadd.f32 %v771, %v772
    %v774 = vadd.f32 %v762, %v763
    %v775 = vsel %vm193, %v764, 0.0
    %v776 = vadd.f32 %v774, %v775
    %v777 = vrot.slane %v776, 4
    %v778 = vadd.f32 %v776, %v777
    %v779 = vrot.slane %v778, 2
    %v780 = vadd.f32 %v778, %v779
    %v781 = vrot.slane %v780, 1
    %v782 = vadd.f32 %v780, %v781
    %v783 = vsub.f32 %v708, %v773
    %v784 = vsub.f32 %v709, %v782
    %v785 = vadd.f32 %v633, %v783
    %v786 = vadd.f32 %v634, %v784
    %v787 = vmul.f32 %v785, 0.25
    %v788 = vmul.f32 %v786, 0.25
    %v790 = vrot.slane %v46, 1
    %v793 = vmul.f32 %v787, %v46
    %v794 = vmul.f32 %v788, %v790
    %v797 = vrot.slane %v794, 7
    %vm798 = vcmask 1041409
    %v799 = vsel %vm798, %v797, %v793
    %v801 = vsel %vm45, %v799, 0.0
    %v802 = vadd.f32 %v801, 0.0
    %803 = vst [vmem:[#allocation4] sm:$0x3] %v802
    %804 = vst [vmem:[#allocation2] sm:$0x3] %v168
    // Predicated region
    $region26: #{tpu_custom_call.1} parent=1 // pred_check
      _
    $region27: #{tpu_custom_call.1} parent=1 // pred_check_branch
      %806 = sbr.rel (0) target = $region29
    $region28: #{tpu_custom_call.1} parent=1 // pred_region
      %808 = vsyncadd [#allocation3], 0
      %s810 = sshll.u32 [#allocation2], 4
      %s811 = int_to_ptr.vmem [resolvable:$true] %s810
      %s812 = sshll.u32 %s6, 4
      %s813 = int_to_ptr.hbm [resolvable:$true] %s812
      %815 = dma.vmem_to_hbm [thread:$0]  %s811, 32, %s813, [#allocation3]
    $region29: #{tpu_custom_call.1} parent=1 // pred_fallthru
      _
    // Predicated region
    $region30: #{tpu_custom_call.1} parent=1 // pred_check
      _
    $region31: #{tpu_custom_call.1} parent=1 // pred_check_branch
      %817 = sbr.rel (0) target = $region33
    $region32: #{tpu_custom_call.1} parent=1 // pred_region
      %819 = vsyncadd [#allocation5], 0
      %s821 = sshll.u32 [#allocation4], 4
      %s822 = int_to_ptr.vmem [resolvable:$true] %s821
      %s823 = sshll.u32 %s7, 4
      %s824 = int_to_ptr.hbm [resolvable:$true] %s823
      %826 = dma.vmem_to_hbm [thread:$0]  %s822, 32, %s824, [#allocation5]
    $region33: #{tpu_custom_call.1} parent=1 // pred_fallthru
      _
    // Predicated region
    $region34: #{tpu_custom_call.1} parent=1 // pred_check
      _
    $region35: #{tpu_custom_call.1} parent=1 // pred_check_branch
      %828 = sbr.rel (0) target = $region37
    $region36: #{tpu_custom_call.1} parent=1 // pred_region
      %830 = dma.done [#allocation3], 32
    $region37: #{tpu_custom_call.1} parent=1 // pred_fallthru
      _
    // Predicated region
    $region38: #{tpu_custom_call.1} parent=1 // pred_check
      _
    $region39: #{tpu_custom_call.1} parent=1 // pred_check_branch
      %832 = sbr.rel (0) target = $region41
    $region40: #{tpu_custom_call.1} parent=1 // pred_region
      %834 = dma.done [#allocation5], 32
    $region41: #{tpu_custom_call.1} parent=1 // pred_fallthru
      _
    %835 = vsyncpa [#allocation3], 1
    %836 = vsyncpa [#allocation5], 1

</llo_original>
